<compile_context>
chip_gen: v5e
topology: v5e:2x2
jax: 0.10.0
libtpu: 0.0.40
codegen_flags: <defaults>
</compile_context>

<pallas_src>
import functools

import jax
import jax.numpy as jnp
from jax import lax
from jax.experimental import pallas as pl
from jax.experimental.pallas import tpu as pltpu


# ----------------------------------------------------------------------------
# Fused kernel: SE attention -> channel-group weighted sums -> conv_top (3x3 +
# BN) and conv_bot (1x1 + BN + ReLU, 3x3 + BN), one batch image per grid step.
# All tensors are channels-first with spatial flattened onto the lane axis.
# ----------------------------------------------------------------------------
def _slimconv_kernel(x_ref,
                     se_w1_ref, se_sh1_ref, se_w2_ref, se_b2_ref,
                     se_w2f_ref, se_b2f_ref,
                     ct_w_ref, ct_sh_ref,
                     cb_w1_ref, cb_sh1_ref, cb_w2_ref, cb_sh2_ref,
                     o_ref, *, r_1, W):
    x = x_ref[0]                                   # (C, H*W) f32, lane-dense
    C, HW = x.shape
    Cg = C // r_1
    Ho, Wo = HW // W - 2, W - 2
    L = (Ho - 1) * W + Wo                          # valid flat-output extent

    # ---- SE: global avg-pool -> 1x1 -> BN -> ReLU -> 1x1 -> sigmoid ---------
    # (column-vector form; 1/(H*W) and BN scale are folded into se_w1 / se_sh1)
    psum = jnp.sum(x, axis=1, keepdims=True)                             # (C,1)
    h = jnp.dot(se_w1_ref[...], psum,
                preferred_element_type=jnp.float32) + se_sh1_ref[...]    # (Cse,1)
    h = jnp.maximum(h, 0.0)
    z = jnp.dot(se_w2_ref[...], h,
                preferred_element_type=jnp.float32) + se_b2_ref[...]     # (C,1)
    zf = jnp.dot(se_w2f_ref[...], h,
                 preferred_element_type=jnp.float32) + se_b2f_ref[...]   # flipped
    att = 1.0 / (1.0 + jnp.exp(-z))                                      # (C,1)
    attf = 1.0 / (1.0 + jnp.exp(-zf))                                    # (C,1)

    # ---- x*att and x*flip(att), summed over the r_1 channel groups ----------
    top = x[0:Cg, :] * att[0:Cg, :]
    bot = x[0:Cg, :] * attf[0:Cg, :]
    for g in range(1, r_1):
        lo = g * Cg
        xg = x[lo:lo + Cg, :]
        top = top + xg * att[lo:lo + Cg, :]
        bot = bot + xg * attf[lo:lo + Cg, :]

    # ---- conv_top: 3x3 VALID conv (+ folded bias/BN) as 9 shifted matmuls ---
    acc_t = None
    for dy in range(3):
        for dx in range(3):
            off = dy * W + dx
            patch = top[:, off:off + L].astype(jnp.bfloat16)             # (Cg,L)
            term = jnp.dot(ct_w_ref[dy, dx], patch,
                           preferred_element_type=jnp.float32)
            acc_t = term if acc_t is None else acc_t + term
    out_top = acc_t + ct_sh_ref[...]                                     # (Cg,L)

    # ---- conv_bot: 1x1 conv + BN + ReLU, then 3x3 conv (+ folded bias/BN) ---
    h1 = jnp.dot(cb_w1_ref[...], bot.astype(jnp.bfloat16),
                 preferred_element_type=jnp.float32) + cb_sh1_ref[...]   # (Cg,HW)
    h1 = jnp.maximum(h1, 0.0)
    acc_b = None
    for dy in range(3):
        for dx in range(3):
            off = dy * W + dx
            patch = h1[:, off:off + L].astype(jnp.bfloat16)
            term = jnp.dot(cb_w2_ref[dy, dx], patch,
                           preferred_element_type=jnp.float32)
            acc_b = term if acc_b is None else acc_b + term
    out_bot = acc_b + cb_sh2_ref[...]                                    # (C2,L)

    # single lane-dense store: channels-first, spatial (row-strided) on lanes
    o_ref[0] = jnp.concatenate([out_top, out_bot], axis=0)               # (Cg+C2,L)


# ----------------------------------------------------------------------------
# Trace-time parameter preparation (all free / tiny XLA ops on weights):
# transpose to (Cout, Cin), fold BN scale into weights, fold conv-bias+BN
# shift into a per-channel column, pre-flip the 2nd SE weight, cast to bf16.
# ----------------------------------------------------------------------------
def _prep_params(p, H, W):
    inv_hw = 1.0 / (H * W)
    bf16 = jnp.bfloat16

    s1, t1 = p["se_bn_s"].T, p["se_bn_t"].T                      # (Cse,1)
    se_w1 = p["se_w1"].T * s1 * inv_hw                           # (Cse,C)
    se_sh1 = p["se_b1"].T * s1 + t1                              # (Cse,1)
    se_w2 = p["se_w2"].T                                         # (C,Cse)
    se_b2 = p["se_b2"].T                                         # (C,1)
    se_w2f = se_w2[::-1]                                         # channel flip
    se_b2f = se_b2[::-1]

    cts, ctt = p["ct_bn_s"].T, p["ct_bn_t"].T                    # (Cg,1)
    ct_w = (jnp.transpose(p["ct_w"], (0, 1, 3, 2))
            * cts[None, None]).astype(bf16)                      # (3,3,Cg,Cg)
    ct_sh = p["ct_b"].T * cts + ctt                              # (Cg,1)

    s1b, t1b = p["cb_bn1_s"].T, p["cb_bn1_t"].T                  # (Cg,1)
    cb_w1 = (p["cb_w1"].T * s1b).astype(bf16)                    # (Cg,Cg)
    cb_sh1 = p["cb_b1"].T * s1b + t1b                            # (Cg,1)
    s2b, t2b = p["cb_bn2_s"].T, p["cb_bn2_t"].T                  # (C2,1)
    cb_w2 = (jnp.transpose(p["cb_w2"], (0, 1, 3, 2))
             * s2b[None, None]).astype(bf16)                     # (3,3,C2,Cg)
    cb_sh2 = p["cb_b2"].T * s2b + t2b                            # (C2,1)

    return (se_w1, se_sh1, se_w2, se_b2, se_w2f, se_b2f,
            ct_w, ct_sh, cb_w1, cb_sh1, cb_w2, cb_sh2)


# ----------------------------------------------------------------------------
# Wrapper: NCHW in -> NCHW out.  Only free reshapes plus a tiny pad/slice on
# the (small) output tensor happen outside the kernel.
# ----------------------------------------------------------------------------
def slim_conv_forward(x_nchw, p, r_1, r_2):
    B, C, H, W = x_nchw.shape
    Cg, C2 = C // r_1, C // r_2
    Ctot = Cg + C2
    Ho, Wo = H - 2, W - 2
    HW = H * W
    L = (Ho - 1) * W + Wo                          # flat row-strided extent

    x_flat = x_nchw.reshape(B, C, HW).astype(jnp.float32)   # free (contiguous)
    consts = _prep_params(p, H, W)

    in_specs = [pl.BlockSpec((1, C, HW), lambda b: (b, 0, 0))]
    for a in consts:
        in_specs.append(
            pl.BlockSpec(a.shape, functools.partial(lambda b, nd: (0,) * nd,
                                                    nd=a.ndim)))

    raw = pl.pallas_call(
        functools.partial(_slimconv_kernel, r_1=r_1, W=W),
        out_shape=jax.ShapeDtypeStruct((B, Ctot, L), jnp.float32),
        grid=(B,),
        in_specs=in_specs,
        out_specs=pl.BlockSpec((1, Ctot, L), lambda b: (b, 0, 0)),
        compiler_params=pltpu.CompilerParams(
            dimension_semantics=("parallel",),
            vmem_limit_bytes=32 * 1024 * 1024),
    )(x_flat, *consts)

    # drop the (W - Wo) junk columns per output row; output is NCHW already.
    out = jnp.pad(raw, ((0, 0), (0, 0), (0, Ho * W - L)))
    out = out.reshape(B, Ctot, Ho, W)[:, :, :, :Wo]
    return out


# ----------------------------------------------------------------------------
# Deterministic synthetic parameters (shapes follow the PyTorch __init__).
# ----------------------------------------------------------------------------
def init_params(key, C, r_se, r_1, r_2):
    Cse, Cg, C2 = C // r_se, C // r_1, C // r_2
    ks = iter(jax.random.split(key, 32))

    def w(shape, scale=0.1):
        return jax.random.normal(next(ks), shape, jnp.float32) * scale

    def bn(n):
        gamma = 1.0 + 0.1 * jax.random.normal(next(ks), (1, n), jnp.float32)
        beta = 0.1 * jax.random.normal(next(ks), (1, n), jnp.float32)
        mean = 0.1 * jax.random.normal(next(ks), (1, n), jnp.float32)
        var = jax.random.uniform(next(ks), (1, n), jnp.float32, minval=0.5, maxval=1.5)
        scale = gamma / jnp.sqrt(var + 1e-5)
        return scale, beta - mean * scale

    p = {}
    p["se_w1"], p["se_b1"] = w((C, Cse)), w((1, Cse))
    p["se_bn_s"], p["se_bn_t"] = bn(Cse)
    p["se_w2"], p["se_b2"] = w((Cse, C)), w((1, C))
    p["ct_w"], p["ct_b"] = w((3, 3, Cg, Cg)), w((1, Cg))
    p["ct_bn_s"], p["ct_bn_t"] = bn(Cg)
    p["cb_w1"], p["cb_b1"] = w((Cg, Cg)), w((1, Cg))
    p["cb_bn1_s"], p["cb_bn1_t"] = bn(Cg)
    p["cb_w2"], p["cb_b2"] = w((3, 3, Cg, C2)), w((1, C2))
    p["cb_bn2_s"], p["cb_bn2_t"] = bn(C2)
    return p


# ----------------------------------------------------------------------------
# Plain-JAX f32 reference (same math) for the correctness check.
# ----------------------------------------------------------------------------
def reference_forward(x_nchw, p, r_1, r_2):
    x = jnp.transpose(x_nchw, (0, 2, 3, 1)).astype(jnp.float32)
    B, H, W, C = x.shape
    Cg = C // r_1
    pooled = x.mean(axis=(1, 2))
    h = jnp.maximum((pooled @ p["se_w1"] + p["se_b1"]) * p["se_bn_s"] + p["se_bn_t"], 0.0)
    att = jax.nn.sigmoid(h @ p["se_w2"] + p["se_b2"])
    att_f = att[:, ::-1]
    top = sum(x[..., g * Cg:(g + 1) * Cg] * att[:, None, None, g * Cg:(g + 1) * Cg]
              for g in range(r_1))
    bot = sum(x[..., g * Cg:(g + 1) * Cg] * att_f[:, None, None, g * Cg:(g + 1) * Cg]
              for g in range(r_1))
    dn = ("NHWC", "HWIO", "NHWC")
    t = lax.conv_general_dilated(top, p["ct_w"], (1, 1), "VALID",
                                 dimension_numbers=dn) + p["ct_b"]
    t = t * p["ct_bn_s"] + p["ct_bn_t"]
    b1 = jnp.maximum((jnp.einsum("bhwc,cd->bhwd", bot, p["cb_w1"]) + p["cb_b1"])
                     * p["cb_bn1_s"] + p["cb_bn1_t"], 0.0)
    b2 = lax.conv_general_dilated(b1, p["cb_w2"], (1, 1), "VALID",
                                  dimension_numbers=dn) + p["cb_b2"]
    b2 = b2 * p["cb_bn2_s"] + p["cb_bn2_t"]
    return jnp.transpose(jnp.concatenate([t, b2], axis=-1), (0, 3, 1, 2))


if __name__ == "__main__":
    B, C, H, W = 2, 8, 16, 16
    r_se, r_1, r_2 = 2, 2, 4

    key = jax.random.PRNGKey(0)
    kx, kp = jax.random.split(key)
    x = jax.random.normal(kx, (B, C, H, W), jnp.float32)
    params = init_params(kp, C, r_se, r_1, r_2)

    fwd = jax.jit(slim_conv_forward, static_argnums=(2, 3))
    out = jax.block_until_ready(fwd(x, params, r_1, r_2))

    assert out.shape == (B, C // r_1 + C // r_2, H - 2, W - 2), out.shape
    ref = reference_forward(x, params, r_1, r_2)
    # bf16 MXU operands with f32 accumulation -> slightly looser tolerance.
    assert jnp.allclose(out, ref, atol=2e-2, rtol=2e-2), "mismatch vs JAX reference"

    print("KERNEL_OK")
</pallas_src>

<mosaic_0001>
module attributes {stable_mosaic.version = 11 : i64} {
  func.func @_slimconv_kernel(%arg0: i32, %arg1: memref<1x8x256xf32, #tpu.memory_space<vmem>>, %arg2: memref<4x8xf32, #tpu.memory_space<vmem>>, %arg3: memref<4x1xf32, #tpu.memory_space<vmem>>, %arg4: memref<8x4xf32, #tpu.memory_space<vmem>>, %arg5: memref<8x1xf32, #tpu.memory_space<vmem>>, %arg6: memref<8x4xf32, #tpu.memory_space<vmem>>, %arg7: memref<8x1xf32, #tpu.memory_space<vmem>>, %arg8: memref<3x3x4x4xbf16, #tpu.memory_space<vmem>>, %arg9: memref<4x1xf32, #tpu.memory_space<vmem>>, %arg10: memref<4x4xbf16, #tpu.memory_space<vmem>>, %arg11: memref<4x1xf32, #tpu.memory_space<vmem>>, %arg12: memref<3x3x2x4xbf16, #tpu.memory_space<vmem>>, %arg13: memref<2x1xf32, #tpu.memory_space<vmem>>, %arg14: memref<1x6x222xf32, #tpu.memory_space<vmem>>) attributes {dimension_semantics = [#tpu.dimension_semantics<parallel>], iteration_bounds = array<i64: 2>, scalar_prefetch = 0 : i64, scratch_operands = 0 : i64, tpu.core_type = #tpu.core_type<tc>, window_params = [{transform_indices = @transform_0, window_bounds = array<i64: 1, 8, 256>}, {pipeline_mode = #tpu.pipeline_mode<synchronous>, transform_indices = @transform_1, window_bounds = array<i64: 4, 8>}, {pipeline_mode = #tpu.pipeline_mode<synchronous>, transform_indices = @transform_2, window_bounds = array<i64: 4, 1>}, {pipeline_mode = #tpu.pipeline_mode<synchronous>, transform_indices = @transform_3, window_bounds = array<i64: 8, 4>}, {pipeline_mode = #tpu.pipeline_mode<synchronous>, transform_indices = @transform_4, window_bounds = array<i64: 8, 1>}, {pipeline_mode = #tpu.pipeline_mode<synchronous>, transform_indices = @transform_5, window_bounds = array<i64: 8, 4>}, {pipeline_mode = #tpu.pipeline_mode<synchronous>, transform_indices = @transform_6, window_bounds = array<i64: 8, 1>}, {pipeline_mode = #tpu.pipeline_mode<synchronous>, transform_indices = @transform_7, window_bounds = array<i64: 3, 3, 4, 4>}, {pipeline_mode = #tpu.pipeline_mode<synchronous>, transform_indices = @transform_8, window_bounds = array<i64: 4, 1>}, {pipeline_mode = #tpu.pipeline_mode<synchronous>, transform_indices = @transform_9, window_bounds = array<i64: 4, 4>}, {pipeline_mode = #tpu.pipeline_mode<synchronous>, transform_indices = @transform_10, window_bounds = array<i64: 4, 1>}, {pipeline_mode = #tpu.pipeline_mode<synchronous>, transform_indices = @transform_11, window_bounds = array<i64: 3, 3, 2, 4>}, {pipeline_mode = #tpu.pipeline_mode<synchronous>, transform_indices = @transform_12, window_bounds = array<i64: 2, 1>}, {transform_indices = @transform_13, window_bounds = array<i64: 1, 6, 222>}]} {
    %c0 = arith.constant 0 : index
    %c0_0 = arith.constant 0 : index
    %c0_1 = arith.constant 0 : index
    %0 = vector.load %arg1[%c0, %c0_0, %c0_1] : memref<1x8x256xf32, #tpu.memory_space<vmem>>, vector<1x8x256xf32>
    %1 = vector.shape_cast %0 : vector<1x8x256xf32> to vector<8x256xf32>
    %cst = arith.constant dense<0.000000e+00> : vector<8xf32>
    %2 = vector.multi_reduction <add>, %1, %cst [1] : vector<8x256xf32> to vector<8xf32>
    %3 = vector.shape_cast %2 : vector<8xf32> to vector<8x1xf32>
    %c0_2 = arith.constant 0 : index
    %c0_3 = arith.constant 0 : index
    %4 = vector.load %arg2[%c0_2, %c0_3] : memref<4x8xf32, #tpu.memory_space<vmem>>, vector<4x8xf32>
    %cst_4 = arith.constant dense<0.000000e+00> : vector<4x1xf32>
    %5 = tpu.matmul %4, %3, %cst_4 {dimension_numbers = #tpu.dot_dimension_numbers<[1], [0], [0], [1], [0, 0, 1, 1], [], []>} : vector<4x8xf32>, vector<8x1xf32>, vector<4x1xf32> -> vector<4x1xf32>
    %c0_5 = arith.constant 0 : index
    %c0_6 = arith.constant 0 : index
    %6 = vector.load %arg3[%c0_5, %c0_6] : memref<4x1xf32, #tpu.memory_space<vmem>>, vector<4x1xf32>
    %7 = arith.addf %5, %6 : vector<4x1xf32>
    %cst_7 = arith.constant 0.000000e+00 : f32
    %8 = vector.broadcast %cst_7 : f32 to vector<4x1xf32>
    %9 = arith.maximumf %7, %8 : vector<4x1xf32>
    %c0_8 = arith.constant 0 : index
    %c0_9 = arith.constant 0 : index
    %10 = vector.load %arg4[%c0_8, %c0_9] : memref<8x4xf32, #tpu.memory_space<vmem>>, vector<8x4xf32>
    %cst_10 = arith.constant dense<0.000000e+00> : vector<8x1xf32>
    %11 = tpu.matmul %10, %9, %cst_10 {dimension_numbers = #tpu.dot_dimension_numbers<[1], [0], [0], [1], [0, 0, 1, 1], [], []>} : vector<8x4xf32>, vector<4x1xf32>, vector<8x1xf32> -> vector<8x1xf32>
    %c0_11 = arith.constant 0 : index
    %c0_12 = arith.constant 0 : index
    %12 = vector.load %arg5[%c0_11, %c0_12] : memref<8x1xf32, #tpu.memory_space<vmem>>, vector<8x1xf32>
    %13 = arith.addf %11, %12 : vector<8x1xf32>
    %c0_13 = arith.constant 0 : index
    %c0_14 = arith.constant 0 : index
    %14 = vector.load %arg6[%c0_13, %c0_14] : memref<8x4xf32, #tpu.memory_space<vmem>>, vector<8x4xf32>
    %cst_15 = arith.constant dense<0.000000e+00> : vector<8x1xf32>
    %15 = tpu.matmul %14, %9, %cst_15 {dimension_numbers = #tpu.dot_dimension_numbers<[1], [0], [0], [1], [0, 0, 1, 1], [], []>} : vector<8x4xf32>, vector<4x1xf32>, vector<8x1xf32> -> vector<8x1xf32>
    %c0_16 = arith.constant 0 : index
    %c0_17 = arith.constant 0 : index
    %16 = vector.load %arg7[%c0_16, %c0_17] : memref<8x1xf32, #tpu.memory_space<vmem>>, vector<8x1xf32>
    %17 = arith.addf %15, %16 : vector<8x1xf32>
    %cst_18 = arith.constant 0.000000e+00 : f32
    %18 = vector.broadcast %cst_18 : f32 to vector<8x1xf32>
    %19 = arith.subf %18, %13 : vector<8x1xf32>
    %20 = math.exp %19 : vector<8x1xf32>
    %cst_19 = arith.constant 1.000000e+00 : f32
    %21 = vector.broadcast %cst_19 : f32 to vector<8x1xf32>
    %22 = arith.addf %21, %20 : vector<8x1xf32>
    %cst_20 = arith.constant 1.000000e+00 : f32
    %23 = vector.broadcast %cst_20 : f32 to vector<8x1xf32>
    %24 = arith.divf %23, %22 : vector<8x1xf32>
    %cst_21 = arith.constant 0.000000e+00 : f32
    %25 = vector.broadcast %cst_21 : f32 to vector<8x1xf32>
    %26 = arith.subf %25, %17 : vector<8x1xf32>
    %27 = math.exp %26 : vector<8x1xf32>
    %cst_22 = arith.constant 1.000000e+00 : f32
    %28 = vector.broadcast %cst_22 : f32 to vector<8x1xf32>
    %29 = arith.addf %28, %27 : vector<8x1xf32>
    %cst_23 = arith.constant 1.000000e+00 : f32
    %30 = vector.broadcast %cst_23 : f32 to vector<8x1xf32>
    %31 = arith.divf %30, %29 : vector<8x1xf32>
    %32 = vector.extract_strided_slice %1 {offsets = [0, 0], sizes = [4, 256], strides = [1, 1]} : vector<8x256xf32> to vector<4x256xf32>
    %33 = vector.extract_strided_slice %24 {offsets = [0, 0], sizes = [4, 1], strides = [1, 1]} : vector<8x1xf32> to vector<4x1xf32>
    %34 = vector.broadcast %33 : vector<4x1xf32> to vector<4x256xf32>
    %35 = arith.mulf %32, %34 : vector<4x256xf32>
    %36 = vector.extract_strided_slice %1 {offsets = [0, 0], sizes = [4, 256], strides = [1, 1]} : vector<8x256xf32> to vector<4x256xf32>
    %37 = vector.extract_strided_slice %31 {offsets = [0, 0], sizes = [4, 1], strides = [1, 1]} : vector<8x1xf32> to vector<4x1xf32>
    %38 = vector.broadcast %37 : vector<4x1xf32> to vector<4x256xf32>
    %39 = arith.mulf %36, %38 : vector<4x256xf32>
    %40 = vector.extract_strided_slice %1 {offsets = [4, 0], sizes = [4, 256], strides = [1, 1]} : vector<8x256xf32> to vector<4x256xf32>
    %41 = vector.extract_strided_slice %24 {offsets = [4, 0], sizes = [4, 1], strides = [1, 1]} : vector<8x1xf32> to vector<4x1xf32>
    %42 = vector.broadcast %41 : vector<4x1xf32> to vector<4x256xf32>
    %43 = arith.mulf %40, %42 : vector<4x256xf32>
    %44 = arith.addf %35, %43 : vector<4x256xf32>
    %45 = vector.extract_strided_slice %31 {offsets = [4, 0], sizes = [4, 1], strides = [1, 1]} : vector<8x1xf32> to vector<4x1xf32>
    %46 = vector.broadcast %45 : vector<4x1xf32> to vector<4x256xf32>
    %47 = arith.mulf %40, %46 : vector<4x256xf32>
    %48 = arith.addf %39, %47 : vector<4x256xf32>
    %49 = vector.extract_strided_slice %44 {offsets = [0, 0], sizes = [4, 222], strides = [1, 1]} : vector<4x256xf32> to vector<4x222xf32>
    %50 = arith.truncf %49 : vector<4x222xf32> to vector<4x222xbf16>
    %c0_24 = arith.constant 0 : index
    %c0_25 = arith.constant 0 : index
    %c0_26 = arith.constant 0 : index
    %c0_27 = arith.constant 0 : index
    %51 = vector.load %arg8[%c0_24, %c0_25, %c0_26, %c0_27] : memref<3x3x4x4xbf16, #tpu.memory_space<vmem>>, vector<1x1x4x4xbf16>
    %52 = vector.shape_cast %51 : vector<1x1x4x4xbf16> to vector<4x4xbf16>
    %cst_28 = arith.constant dense<0.000000e+00> : vector<4x222xf32>
    %53 = tpu.matmul %52, %50, %cst_28 {dimension_numbers = #tpu.dot_dimension_numbers<[1], [0], [0], [1], [0, 0, 1, 1], [], []>} : vector<4x4xbf16>, vector<4x222xbf16>, vector<4x222xf32> -> vector<4x222xf32>
    %54 = vector.extract_strided_slice %44 {offsets = [0, 1], sizes = [4, 222], strides = [1, 1]} : vector<4x256xf32> to vector<4x222xf32>
    %55 = arith.truncf %54 : vector<4x222xf32> to vector<4x222xbf16>
    %c0_29 = arith.constant 0 : index
    %c1 = arith.constant 1 : index
    %c0_30 = arith.constant 0 : index
    %c0_31 = arith.constant 0 : index
    %56 = vector.load %arg8[%c0_29, %c1, %c0_30, %c0_31] : memref<3x3x4x4xbf16, #tpu.memory_space<vmem>>, vector<1x1x4x4xbf16>
    %57 = vector.shape_cast %56 : vector<1x1x4x4xbf16> to vector<4x4xbf16>
    %cst_32 = arith.constant dense<0.000000e+00> : vector<4x222xf32>
    %58 = tpu.matmul %57, %55, %cst_32 {dimension_numbers = #tpu.dot_dimension_numbers<[1], [0], [0], [1], [0, 0, 1, 1], [], []>} : vector<4x4xbf16>, vector<4x222xbf16>, vector<4x222xf32> -> vector<4x222xf32>
    %59 = arith.addf %53, %58 : vector<4x222xf32>
    %60 = vector.extract_strided_slice %44 {offsets = [0, 2], sizes = [4, 222], strides = [1, 1]} : vector<4x256xf32> to vector<4x222xf32>
    %61 = arith.truncf %60 : vector<4x222xf32> to vector<4x222xbf16>
    %c0_33 = arith.constant 0 : index
    %c2 = arith.constant 2 : index
    %c0_34 = arith.constant 0 : index
    %c0_35 = arith.constant 0 : index
    %62 = vector.load %arg8[%c0_33, %c2, %c0_34, %c0_35] : memref<3x3x4x4xbf16, #tpu.memory_space<vmem>>, vector<1x1x4x4xbf16>
    %63 = vector.shape_cast %62 : vector<1x1x4x4xbf16> to vector<4x4xbf16>
    %cst_36 = arith.constant dense<0.000000e+00> : vector<4x222xf32>
    %64 = tpu.matmul %63, %61, %cst_36 {dimension_numbers = #tpu.dot_dimension_numbers<[1], [0], [0], [1], [0, 0, 1, 1], [], []>} : vector<4x4xbf16>, vector<4x222xbf16>, vector<4x222xf32> -> vector<4x222xf32>
    %65 = arith.addf %59, %64 : vector<4x222xf32>
    %66 = vector.extract_strided_slice %44 {offsets = [0, 16], sizes = [4, 222], strides = [1, 1]} : vector<4x256xf32> to vector<4x222xf32>
    %67 = arith.truncf %66 : vector<4x222xf32> to vector<4x222xbf16>
    %c1_37 = arith.constant 1 : index
    %c0_38 = arith.constant 0 : index
    %c0_39 = arith.constant 0 : index
    %c0_40 = arith.constant 0 : index
    %68 = vector.load %arg8[%c1_37, %c0_38, %c0_39, %c0_40] : memref<3x3x4x4xbf16, #tpu.memory_space<vmem>>, vector<1x1x4x4xbf16>
    %69 = vector.shape_cast %68 : vector<1x1x4x4xbf16> to vector<4x4xbf16>
    %cst_41 = arith.constant dense<0.000000e+00> : vector<4x222xf32>
    %70 = tpu.matmul %69, %67, %cst_41 {dimension_numbers = #tpu.dot_dimension_numbers<[1], [0], [0], [1], [0, 0, 1, 1], [], []>} : vector<4x4xbf16>, vector<4x222xbf16>, vector<4x222xf32> -> vector<4x222xf32>
    %71 = arith.addf %65, %70 : vector<4x222xf32>
    %72 = vector.extract_strided_slice %44 {offsets = [0, 17], sizes = [4, 222], strides = [1, 1]} : vector<4x256xf32> to vector<4x222xf32>
    %73 = arith.truncf %72 : vector<4x222xf32> to vector<4x222xbf16>
    %c1_42 = arith.constant 1 : index
    %c1_43 = arith.constant 1 : index
    %c0_44 = arith.constant 0 : index
    %c0_45 = arith.constant 0 : index
    %74 = vector.load %arg8[%c1_42, %c1_43, %c0_44, %c0_45] : memref<3x3x4x4xbf16, #tpu.memory_space<vmem>>, vector<1x1x4x4xbf16>
    %75 = vector.shape_cast %74 : vector<1x1x4x4xbf16> to vector<4x4xbf16>
    %cst_46 = arith.constant dense<0.000000e+00> : vector<4x222xf32>
    %76 = tpu.matmul %75, %73, %cst_46 {dimension_numbers = #tpu.dot_dimension_numbers<[1], [0], [0], [1], [0, 0, 1, 1], [], []>} : vector<4x4xbf16>, vector<4x222xbf16>, vector<4x222xf32> -> vector<4x222xf32>
    %77 = arith.addf %71, %76 : vector<4x222xf32>
    %78 = vector.extract_strided_slice %44 {offsets = [0, 18], sizes = [4, 222], strides = [1, 1]} : vector<4x256xf32> to vector<4x222xf32>
    %79 = arith.truncf %78 : vector<4x222xf32> to vector<4x222xbf16>
    %c1_47 = arith.constant 1 : index
    %c2_48 = arith.constant 2 : index
    %c0_49 = arith.constant 0 : index
    %c0_50 = arith.constant 0 : index
    %80 = vector.load %arg8[%c1_47, %c2_48, %c0_49, %c0_50] : memref<3x3x4x4xbf16, #tpu.memory_space<vmem>>, vector<1x1x4x4xbf16>
    %81 = vector.shape_cast %80 : vector<1x1x4x4xbf16> to vector<4x4xbf16>
    %cst_51 = arith.constant dense<0.000000e+00> : vector<4x222xf32>
    %82 = tpu.matmul %81, %79, %cst_51 {dimension_numbers = #tpu.dot_dimension_numbers<[1], [0], [0], [1], [0, 0, 1, 1], [], []>} : vector<4x4xbf16>, vector<4x222xbf16>, vector<4x222xf32> -> vector<4x222xf32>
    %83 = arith.addf %77, %82 : vector<4x222xf32>
    %84 = vector.extract_strided_slice %44 {offsets = [0, 32], sizes = [4, 222], strides = [1, 1]} : vector<4x256xf32> to vector<4x222xf32>
    %85 = arith.truncf %84 : vector<4x222xf32> to vector<4x222xbf16>
    %c2_52 = arith.constant 2 : index
    %c0_53 = arith.constant 0 : index
    %c0_54 = arith.constant 0 : index
    %c0_55 = arith.constant 0 : index
    %86 = vector.load %arg8[%c2_52, %c0_53, %c0_54, %c0_55] : memref<3x3x4x4xbf16, #tpu.memory_space<vmem>>, vector<1x1x4x4xbf16>
    %87 = vector.shape_cast %86 : vector<1x1x4x4xbf16> to vector<4x4xbf16>
    %cst_56 = arith.constant dense<0.000000e+00> : vector<4x222xf32>
    %88 = tpu.matmul %87, %85, %cst_56 {dimension_numbers = #tpu.dot_dimension_numbers<[1], [0], [0], [1], [0, 0, 1, 1], [], []>} : vector<4x4xbf16>, vector<4x222xbf16>, vector<4x222xf32> -> vector<4x222xf32>
    %89 = arith.addf %83, %88 : vector<4x222xf32>
    %90 = vector.extract_strided_slice %44 {offsets = [0, 33], sizes = [4, 222], strides = [1, 1]} : vector<4x256xf32> to vector<4x222xf32>
    %91 = arith.truncf %90 : vector<4x222xf32> to vector<4x222xbf16>
    %c2_57 = arith.constant 2 : index
    %c1_58 = arith.constant 1 : index
    %c0_59 = arith.constant 0 : index
    %c0_60 = arith.constant 0 : index
    %92 = vector.load %arg8[%c2_57, %c1_58, %c0_59, %c0_60] : memref<3x3x4x4xbf16, #tpu.memory_space<vmem>>, vector<1x1x4x4xbf16>
    %93 = vector.shape_cast %92 : vector<1x1x4x4xbf16> to vector<4x4xbf16>
    %cst_61 = arith.constant dense<0.000000e+00> : vector<4x222xf32>
    %94 = tpu.matmul %93, %91, %cst_61 {dimension_numbers = #tpu.dot_dimension_numbers<[1], [0], [0], [1], [0, 0, 1, 1], [], []>} : vector<4x4xbf16>, vector<4x222xbf16>, vector<4x222xf32> -> vector<4x222xf32>
    %95 = arith.addf %89, %94 : vector<4x222xf32>
    %96 = vector.extract_strided_slice %44 {offsets = [0, 34], sizes = [4, 222], strides = [1, 1]} : vector<4x256xf32> to vector<4x222xf32>
    %97 = arith.truncf %96 : vector<4x222xf32> to vector<4x222xbf16>
    %c2_62 = arith.constant 2 : index
    %c2_63 = arith.constant 2 : index
    %c0_64 = arith.constant 0 : index
    %c0_65 = arith.constant 0 : index
    %98 = vector.load %arg8[%c2_62, %c2_63, %c0_64, %c0_65] : memref<3x3x4x4xbf16, #tpu.memory_space<vmem>>, vector<1x1x4x4xbf16>
    %99 = vector.shape_cast %98 : vector<1x1x4x4xbf16> to vector<4x4xbf16>
    %cst_66 = arith.constant dense<0.000000e+00> : vector<4x222xf32>
    %100 = tpu.matmul %99, %97, %cst_66 {dimension_numbers = #tpu.dot_dimension_numbers<[1], [0], [0], [1], [0, 0, 1, 1], [], []>} : vector<4x4xbf16>, vector<4x222xbf16>, vector<4x222xf32> -> vector<4x222xf32>
    %101 = arith.addf %95, %100 : vector<4x222xf32>
    %c0_67 = arith.constant 0 : index
    %c0_68 = arith.constant 0 : index
    %102 = vector.load %arg9[%c0_67, %c0_68] : memref<4x1xf32, #tpu.memory_space<vmem>>, vector<4x1xf32>
    %103 = vector.broadcast %102 : vector<4x1xf32> to vector<4x222xf32>
    %104 = arith.addf %101, %103 : vector<4x222xf32>
    %c0_69 = arith.constant 0 : index
    %c0_70 = arith.constant 0 : index
    %105 = vector.load %arg10[%c0_69, %c0_70] : memref<4x4xbf16, #tpu.memory_space<vmem>>, vector<4x4xbf16>
    %106 = arith.truncf %48 : vector<4x256xf32> to vector<4x256xbf16>
    %cst_71 = arith.constant dense<0.000000e+00> : vector<4x256xf32>
    %107 = tpu.matmul %105, %106, %cst_71 {dimension_numbers = #tpu.dot_dimension_numbers<[1], [0], [0], [1], [0, 0, 1, 1], [], []>} : vector<4x4xbf16>, vector<4x256xbf16>, vector<4x256xf32> -> vector<4x256xf32>
    %c0_72 = arith.constant 0 : index
    %c0_73 = arith.constant 0 : index
    %108 = vector.load %arg11[%c0_72, %c0_73] : memref<4x1xf32, #tpu.memory_space<vmem>>, vector<4x1xf32>
    %109 = vector.broadcast %108 : vector<4x1xf32> to vector<4x256xf32>
    %110 = arith.addf %107, %109 : vector<4x256xf32>
    %cst_74 = arith.constant 0.000000e+00 : f32
    %111 = vector.broadcast %cst_74 : f32 to vector<4x256xf32>
    %112 = arith.maximumf %110, %111 : vector<4x256xf32>
    %113 = vector.extract_strided_slice %112 {offsets = [0, 0], sizes = [4, 222], strides = [1, 1]} : vector<4x256xf32> to vector<4x222xf32>
    %114 = arith.truncf %113 : vector<4x222xf32> to vector<4x222xbf16>
    %c0_75 = arith.constant 0 : index
    %c0_76 = arith.constant 0 : index
    %c0_77 = arith.constant 0 : index
    %c0_78 = arith.constant 0 : index
    %115 = vector.load %arg12[%c0_75, %c0_76, %c0_77, %c0_78] : memref<3x3x2x4xbf16, #tpu.memory_space<vmem>>, vector<1x1x2x4xbf16>
    %116 = vector.shape_cast %115 : vector<1x1x2x4xbf16> to vector<2x4xbf16>
    %cst_79 = arith.constant dense<0.000000e+00> : vector<2x222xf32>
    %117 = tpu.matmul %116, %114, %cst_79 {dimension_numbers = #tpu.dot_dimension_numbers<[1], [0], [0], [1], [0, 0, 1, 1], [], []>} : vector<2x4xbf16>, vector<4x222xbf16>, vector<2x222xf32> -> vector<2x222xf32>
    %118 = vector.extract_strided_slice %112 {offsets = [0, 1], sizes = [4, 222], strides = [1, 1]} : vector<4x256xf32> to vector<4x222xf32>
    %119 = arith.truncf %118 : vector<4x222xf32> to vector<4x222xbf16>
    %c0_80 = arith.constant 0 : index
    %c1_81 = arith.constant 1 : index
    %c0_82 = arith.constant 0 : index
    %c0_83 = arith.constant 0 : index
    %120 = vector.load %arg12[%c0_80, %c1_81, %c0_82, %c0_83] : memref<3x3x2x4xbf16, #tpu.memory_space<vmem>>, vector<1x1x2x4xbf16>
    %121 = vector.shape_cast %120 : vector<1x1x2x4xbf16> to vector<2x4xbf16>
    %cst_84 = arith.constant dense<0.000000e+00> : vector<2x222xf32>
    %122 = tpu.matmul %121, %119, %cst_84 {dimension_numbers = #tpu.dot_dimension_numbers<[1], [0], [0], [1], [0, 0, 1, 1], [], []>} : vector<2x4xbf16>, vector<4x222xbf16>, vector<2x222xf32> -> vector<2x222xf32>
    %123 = arith.addf %117, %122 : vector<2x222xf32>
    %124 = vector.extract_strided_slice %112 {offsets = [0, 2], sizes = [4, 222], strides = [1, 1]} : vector<4x256xf32> to vector<4x222xf32>
    %125 = arith.truncf %124 : vector<4x222xf32> to vector<4x222xbf16>
    %c0_85 = arith.constant 0 : index
    %c2_86 = arith.constant 2 : index
    %c0_87 = arith.constant 0 : index
    %c0_88 = arith.constant 0 : index
    %126 = vector.load %arg12[%c0_85, %c2_86, %c0_87, %c0_88] : memref<3x3x2x4xbf16, #tpu.memory_space<vmem>>, vector<1x1x2x4xbf16>
    %127 = vector.shape_cast %126 : vector<1x1x2x4xbf16> to vector<2x4xbf16>
    %cst_89 = arith.constant dense<0.000000e+00> : vector<2x222xf32>
    %128 = tpu.matmul %127, %125, %cst_89 {dimension_numbers = #tpu.dot_dimension_numbers<[1], [0], [0], [1], [0, 0, 1, 1], [], []>} : vector<2x4xbf16>, vector<4x222xbf16>, vector<2x222xf32> -> vector<2x222xf32>
    %129 = arith.addf %123, %128 : vector<2x222xf32>
    %130 = vector.extract_strided_slice %112 {offsets = [0, 16], sizes = [4, 222], strides = [1, 1]} : vector<4x256xf32> to vector<4x222xf32>
    %131 = arith.truncf %130 : vector<4x222xf32> to vector<4x222xbf16>
    %c1_90 = arith.constant 1 : index
    %c0_91 = arith.constant 0 : index
    %c0_92 = arith.constant 0 : index
    %c0_93 = arith.constant 0 : index
    %132 = vector.load %arg12[%c1_90, %c0_91, %c0_92, %c0_93] : memref<3x3x2x4xbf16, #tpu.memory_space<vmem>>, vector<1x1x2x4xbf16>
    %133 = vector.shape_cast %132 : vector<1x1x2x4xbf16> to vector<2x4xbf16>
    %cst_94 = arith.constant dense<0.000000e+00> : vector<2x222xf32>
    %134 = tpu.matmul %133, %131, %cst_94 {dimension_numbers = #tpu.dot_dimension_numbers<[1], [0], [0], [1], [0, 0, 1, 1], [], []>} : vector<2x4xbf16>, vector<4x222xbf16>, vector<2x222xf32> -> vector<2x222xf32>
    %135 = arith.addf %129, %134 : vector<2x222xf32>
    %136 = vector.extract_strided_slice %112 {offsets = [0, 17], sizes = [4, 222], strides = [1, 1]} : vector<4x256xf32> to vector<4x222xf32>
    %137 = arith.truncf %136 : vector<4x222xf32> to vector<4x222xbf16>
    %c1_95 = arith.constant 1 : index
    %c1_96 = arith.constant 1 : index
    %c0_97 = arith.constant 0 : index
    %c0_98 = arith.constant 0 : index
    %138 = vector.load %arg12[%c1_95, %c1_96, %c0_97, %c0_98] : memref<3x3x2x4xbf16, #tpu.memory_space<vmem>>, vector<1x1x2x4xbf16>
    %139 = vector.shape_cast %138 : vector<1x1x2x4xbf16> to vector<2x4xbf16>
    %cst_99 = arith.constant dense<0.000000e+00> : vector<2x222xf32>
    %140 = tpu.matmul %139, %137, %cst_99 {dimension_numbers = #tpu.dot_dimension_numbers<[1], [0], [0], [1], [0, 0, 1, 1], [], []>} : vector<2x4xbf16>, vector<4x222xbf16>, vector<2x222xf32> -> vector<2x222xf32>
    %141 = arith.addf %135, %140 : vector<2x222xf32>
    %142 = vector.extract_strided_slice %112 {offsets = [0, 18], sizes = [4, 222], strides = [1, 1]} : vector<4x256xf32> to vector<4x222xf32>
    %143 = arith.truncf %142 : vector<4x222xf32> to vector<4x222xbf16>
    %c1_100 = arith.constant 1 : index
    %c2_101 = arith.constant 2 : index
    %c0_102 = arith.constant 0 : index
    %c0_103 = arith.constant 0 : index
    %144 = vector.load %arg12[%c1_100, %c2_101, %c0_102, %c0_103] : memref<3x3x2x4xbf16, #tpu.memory_space<vmem>>, vector<1x1x2x4xbf16>
    %145 = vector.shape_cast %144 : vector<1x1x2x4xbf16> to vector<2x4xbf16>
    %cst_104 = arith.constant dense<0.000000e+00> : vector<2x222xf32>
    %146 = tpu.matmul %145, %143, %cst_104 {dimension_numbers = #tpu.dot_dimension_numbers<[1], [0], [0], [1], [0, 0, 1, 1], [], []>} : vector<2x4xbf16>, vector<4x222xbf16>, vector<2x222xf32> -> vector<2x222xf32>
    %147 = arith.addf %141, %146 : vector<2x222xf32>
    %148 = vector.extract_strided_slice %112 {offsets = [0, 32], sizes = [4, 222], strides = [1, 1]} : vector<4x256xf32> to vector<4x222xf32>
    %149 = arith.truncf %148 : vector<4x222xf32> to vector<4x222xbf16>
    %c2_105 = arith.constant 2 : index
    %c0_106 = arith.constant 0 : index
    %c0_107 = arith.constant 0 : index
    %c0_108 = arith.constant 0 : index
    %150 = vector.load %arg12[%c2_105, %c0_106, %c0_107, %c0_108] : memref<3x3x2x4xbf16, #tpu.memory_space<vmem>>, vector<1x1x2x4xbf16>
    %151 = vector.shape_cast %150 : vector<1x1x2x4xbf16> to vector<2x4xbf16>
    %cst_109 = arith.constant dense<0.000000e+00> : vector<2x222xf32>
    %152 = tpu.matmul %151, %149, %cst_109 {dimension_numbers = #tpu.dot_dimension_numbers<[1], [0], [0], [1], [0, 0, 1, 1], [], []>} : vector<2x4xbf16>, vector<4x222xbf16>, vector<2x222xf32> -> vector<2x222xf32>
    %153 = arith.addf %147, %152 : vector<2x222xf32>
    %154 = vector.extract_strided_slice %112 {offsets = [0, 33], sizes = [4, 222], strides = [1, 1]} : vector<4x256xf32> to vector<4x222xf32>
    %155 = arith.truncf %154 : vector<4x222xf32> to vector<4x222xbf16>
    %c2_110 = arith.constant 2 : index
    %c1_111 = arith.constant 1 : index
    %c0_112 = arith.constant 0 : index
    %c0_113 = arith.constant 0 : index
    %156 = vector.load %arg12[%c2_110, %c1_111, %c0_112, %c0_113] : memref<3x3x2x4xbf16, #tpu.memory_space<vmem>>, vector<1x1x2x4xbf16>
    %157 = vector.shape_cast %156 : vector<1x1x2x4xbf16> to vector<2x4xbf16>
    %cst_114 = arith.constant dense<0.000000e+00> : vector<2x222xf32>
    %158 = tpu.matmul %157, %155, %cst_114 {dimension_numbers = #tpu.dot_dimension_numbers<[1], [0], [0], [1], [0, 0, 1, 1], [], []>} : vector<2x4xbf16>, vector<4x222xbf16>, vector<2x222xf32> -> vector<2x222xf32>
    %159 = arith.addf %153, %158 : vector<2x222xf32>
    %160 = vector.extract_strided_slice %112 {offsets = [0, 34], sizes = [4, 222], strides = [1, 1]} : vector<4x256xf32> to vector<4x222xf32>
    %161 = arith.truncf %160 : vector<4x222xf32> to vector<4x222xbf16>
    %c2_115 = arith.constant 2 : index
    %c2_116 = arith.constant 2 : index
    %c0_117 = arith.constant 0 : index
    %c0_118 = arith.constant 0 : index
    %162 = vector.load %arg12[%c2_115, %c2_116, %c0_117, %c0_118] : memref<3x3x2x4xbf16, #tpu.memory_space<vmem>>, vector<1x1x2x4xbf16>
    %163 = vector.shape_cast %162 : vector<1x1x2x4xbf16> to vector<2x4xbf16>
    %cst_119 = arith.constant dense<0.000000e+00> : vector<2x222xf32>
    %164 = tpu.matmul %163, %161, %cst_119 {dimension_numbers = #tpu.dot_dimension_numbers<[1], [0], [0], [1], [0, 0, 1, 1], [], []>} : vector<2x4xbf16>, vector<4x222xbf16>, vector<2x222xf32> -> vector<2x222xf32>
    %165 = arith.addf %159, %164 : vector<2x222xf32>
    %c0_120 = arith.constant 0 : index
    %c0_121 = arith.constant 0 : index
    %166 = vector.load %arg13[%c0_120, %c0_121] : memref<2x1xf32, #tpu.memory_space<vmem>>, vector<2x1xf32>
    %167 = vector.broadcast %166 : vector<2x1xf32> to vector<2x222xf32>
    %168 = arith.addf %165, %167 : vector<2x222xf32>
    %169 = tpu.concatenate %104, %168 in 0 : vector<4x222xf32>, vector<2x222xf32> -> vector<6x222xf32>
    %c0_122 = arith.constant 0 : index
    %c0_123 = arith.constant 0 : index
    %c0_124 = arith.constant 0 : index
    %170 = vector.load %arg14[%c0_122, %c0_123, %c0_124] : memref<1x6x222xf32, #tpu.memory_space<vmem>>, vector<1x6x222xf32>
    %171 = vector.shape_cast %170 : vector<1x6x222xf32> to vector<6x222xf32>
    %172 = vector.shape_cast %169 : vector<6x222xf32> to vector<1x6x222xf32>
    tpu.vector_store %arg14[%c0_122, %c0_123, %c0_124], %172 {strides = array<i32>} : memref<1x6x222xf32, #tpu.memory_space<vmem>>, vector<1x6x222xf32>,
    return
  }
  func.func @transform_0(%arg0: i32) -> (i32, i32, i32) {
    %c0_i32 = arith.constant 0 : i32
    %c0_i32_0 = arith.constant 0 : i32
    %c0_i32_1 = arith.constant 0 : i32
    return %arg0, %c0_i32, %c0_i32_0 : i32, i32, i32
  }
  func.func @transform_1(%arg0: i32) -> (i32, i32) {
    %c0_i32 = arith.constant 0 : i32
    %c0_i32_0 = arith.constant 0 : i32
    %c0_i32_1 = arith.constant 0 : i32
    return %c0_i32, %c0_i32_0 : i32, i32
  }
  func.func @transform_2(%arg0: i32) -> (i32, i32) {
    %c0_i32 = arith.constant 0 : i32
    %c0_i32_0 = arith.constant 0 : i32
    %c0_i32_1 = arith.constant 0 : i32
    return %c0_i32, %c0_i32_0 : i32, i32
  }
  func.func @transform_3(%arg0: i32) -> (i32, i32) {
    %c0_i32 = arith.constant 0 : i32
    %c0_i32_0 = arith.constant 0 : i32
    %c0_i32_1 = arith.constant 0 : i32
    return %c0_i32, %c0_i32_0 : i32, i32
  }
  func.func @transform_4(%arg0: i32) -> (i32, i32) {
    %c0_i32 = arith.constant 0 : i32
    %c0_i32_0 = arith.constant 0 : i32
    %c0_i32_1 = arith.constant 0 : i32
    return %c0_i32, %c0_i32_0 : i32, i32
  }
  func.func @transform_5(%arg0: i32) -> (i32, i32) {
    %c0_i32 = arith.constant 0 : i32
    %c0_i32_0 = arith.constant 0 : i32
    %c0_i32_1 = arith.constant 0 : i32
    return %c0_i32, %c0_i32_0 : i32, i32
  }
  func.func @transform_6(%arg0: i32) -> (i32, i32) {
    %c0_i32 = arith.constant 0 : i32
    %c0_i32_0 = arith.constant 0 : i32
    %c0_i32_1 = arith.constant 0 : i32
    return %c0_i32, %c0_i32_0 : i32, i32
  }
  func.func @transform_7(%arg0: i32) -> (i32, i32, i32, i32) {
    %c0_i32 = arith.constant 0 : i32
    %c0_i32_0 = arith.constant 0 : i32
    %c0_i32_1 = arith.constant 0 : i32
    %c0_i32_2 = arith.constant 0 : i32
    %c0_i32_3 = arith.constant 0 : i32
    return %c0_i32, %c0_i32_0, %c0_i32_1, %c0_i32_2 : i32, i32, i32, i32
  }
  func.func @transform_8(%arg0: i32) -> (i32, i32) {
    %c0_i32 = arith.constant 0 : i32
    %c0_i32_0 = arith.constant 0 : i32
    %c0_i32_1 = arith.constant 0 : i32
    return %c0_i32, %c0_i32_0 : i32, i32
  }
  func.func @transform_9(%arg0: i32) -> (i32, i32) {
    %c0_i32 = arith.constant 0 : i32
    %c0_i32_0 = arith.constant 0 : i32
    %c0_i32_1 = arith.constant 0 : i32
    return %c0_i32, %c0_i32_0 : i32, i32
  }
  func.func @transform_10(%arg0: i32) -> (i32, i32) {
    %c0_i32 = arith.constant 0 : i32
    %c0_i32_0 = arith.constant 0 : i32
    %c0_i32_1 = arith.constant 0 : i32
    return %c0_i32, %c0_i32_0 : i32, i32
  }
  func.func @transform_11(%arg0: i32) -> (i32, i32, i32, i32) {
    %c0_i32 = arith.constant 0 : i32
    %c0_i32_0 = arith.constant 0 : i32
    %c0_i32_1 = arith.constant 0 : i32
    %c0_i32_2 = arith.constant 0 : i32
    %c0_i32_3 = arith.constant 0 : i32
    return %c0_i32, %c0_i32_0, %c0_i32_1, %c0_i32_2 : i32, i32, i32, i32
  }
  func.func @transform_12(%arg0: i32) -> (i32, i32) {
    %c0_i32 = arith.constant 0 : i32
    %c0_i32_0 = arith.constant 0 : i32
    %c0_i32_1 = arith.constant 0 : i32
    return %c0_i32, %c0_i32_0 : i32, i32
  }
  func.func @transform_13(%arg0: i32) -> (i32, i32, i32) {
    %c0_i32 = arith.constant 0 : i32
    %c0_i32_0 = arith.constant 0 : i32
    %c0_i32_1 = arith.constant 0 : i32
    return %arg0, %c0_i32, %c0_i32_0 : i32, i32, i32
  }
}

</mosaic_0001>

<llo_original>
// kernel: slim_conv_forward.1
$region0: #{slim_conv_forward.1}
  #allocation0 [shape = 'u32[]', space=smem, size = 0x4, offset = 0x4, fixed_abs, tag = 'smem constant byte address 0x4 - core index']
  #allocation1 [shape = 'u32[72,128]{1,0:T(1,128)}', space=vmem, size = 0x9000, scoped, tag = 'internal scratch']
  %s0 = inlined_call_operand.vmem [shape: f32[2,8,256], index: 0, kind: input, shape index: {}]
  %s1 = inlined_call_operand.vmem [shape: f32[4,8], index: 1, kind: input, shape index: {}]
  %s2 = inlined_call_operand.vmem [shape: f32[4,1], index: 2, kind: input, shape index: {}]
  %s3 = inlined_call_operand.vmem [shape: f32[8,4], index: 3, kind: input, shape index: {}]
  %s4 = inlined_call_operand.vmem [shape: f32[8,1], index: 4, kind: input, shape index: {}]
  %s5 = inlined_call_operand.vmem [shape: f32[8,4], index: 5, kind: input, shape index: {}]
  %s6 = inlined_call_operand.vmem [shape: f32[8,1], index: 6, kind: input, shape index: {}]
  %s7 = inlined_call_operand.vmem [shape: bf16[3,3,4,4], index: 7, kind: input, shape index: {}]
  %s8 = inlined_call_operand.vmem [shape: f32[4,1], index: 8, kind: input, shape index: {}]
  %s9 = inlined_call_operand.vmem [shape: bf16[4,4], index: 9, kind: input, shape index: {}]
  %s10 = inlined_call_operand.vmem [shape: f32[4,1], index: 10, kind: input, shape index: {}]
  %s11 = inlined_call_operand.vmem [shape: bf16[3,3,2,4], index: 11, kind: input, shape index: {}]
  %s12 = inlined_call_operand.vmem [shape: f32[2,1], index: 12, kind: input, shape index: {}]
  %s13 = inlined_call_operand.vmem [shape: f32[2,6,222], index: 13, kind: output, shape index: {}]
  %s14 = sld [smem:[#allocation0]]
  $region85: #{slim_conv_forward.1} parent=0
    _
  %s16 = ssub.s32 1, %s14
  %s17 = scalar_select 0, %s16, %s14
  loop: start=0, step=1, limit=4
  $region2: #{slim_conv_forward.1} parent=0 // loop_pre_header
    _
  $region3: #{slim_conv_forward.1} parent=0 // loop_header
    %s19 = sphi 0, %s23
    %p20 = scmp.ge.s32.totalorder %s19, 4
    %s29 = sphi 0, %s31
    %s32 = sphi 0, %s29
    %s33 = sphi 0, %s32
    %s49 = sphi 0, %s33
    %s53 = sphi 0, %s53
    %s55 = sphi 0, %s53
    %s56 = sphi 0, %s55
    %s70 = sphi 0, %s56
    %s74 = sphi 0, %s74
    %s76 = sphi 0, %s74
    %s77 = sphi 0, %s76
    %s91 = sphi 0, %s77
    %s95 = sphi 0, %s95
    %s97 = sphi 0, %s95
    %s98 = sphi 0, %s97
    %s112 = sphi 0, %s98
    %s116 = sphi 0, %s116
    %s118 = sphi 0, %s116
    %s119 = sphi 0, %s118
    %s133 = sphi 0, %s119
    %s137 = sphi 0, %s137
    %s139 = sphi 0, %s137
    %s140 = sphi 0, %s139
    %s154 = sphi 0, %s140
    %s158 = sphi 0, %s158
    %s160 = sphi 0, %s158
    %s161 = sphi 0, %s160
    %s175 = sphi 0, %s161
    %s179 = sphi 0, %s179
    %s181 = sphi 0, %s179
    %s182 = sphi 0, %s181
    %s196 = sphi 0, %s182
    %s200 = sphi 0, %s200
    %s202 = sphi 0, %s200
    %s203 = sphi 0, %s202
    %s217 = sphi 0, %s203
    %s221 = sphi 0, %s221
    %s223 = sphi 0, %s221
    %s224 = sphi 0, %s223
    %s238 = sphi 0, %s224
    %s242 = sphi 0, %s242
    %s244 = sphi 0, %s242
    %s245 = sphi 0, %s244
    %s259 = sphi 0, %s245
    %s263 = sphi 0, %s263
    %s265 = sphi 0, %s263
    %s266 = sphi 0, %s265
    %s280 = sphi 0, %s266
    %s284 = sphi 0, %s284
    %s286 = sphi 0, %s284
    %s287 = sphi 0, %s286
    %s301 = sphi 0, %s287
    %s307 = sphi 0, %s309
    %s310 = sphi 0, %s307
    %s311 = sphi 0, %s310
    %s327 = sphi 0, %s311
  $region4: #{slim_conv_forward.1} parent=0 // loop_header_branch
    %22 = sbr.rel (%p20) target = $region8
  $region5: #{slim_conv_forward.1} parent=0 // loop_body
    %s24 = ssub.s32 %s19, 1
    %s25 = ssub.s32 %s19, 2
    %s26 = sadd.s32 %s19, 1
    %s27 = ssub.s32 %s19, %s26
    %p28 = scmp.eq.s32.totalorder %s27, 0
    %s30 = sadd.s32 %s29, 1
    %s31 = scalar_select %p28, %s29, %s30
    %p34 = pneg %p28
    %p35 = scmp.eq.s32.totalorder %s19, 1
    %p36 = por %p34, %p35
    %p37 = scmp.ne.s32.totalorder %s29, %s32
    %p38 = scmp.eq.s32.totalorder %s19, 0
    %p39 = por %p37, %p38
    %p40 = scmp.ne.s32.totalorder %s29, %s32
    %p41 = scmp.eq.s32.totalorder %s24, 1
    %p42 = por %p40, %p41
    %p43 = scmp.ne.s32.totalorder %s32, %s33
    %p44 = scmp.eq.s32.totalorder %s24, 0
    %p45 = por %p43, %p44
    %p46 = scmp.ne.s32.totalorder %s32, %s33
    %p47 = scmp.eq.s32.totalorder %s25, 1
    %p48 = por %p46, %p47
    %p50 = scmp.ne.s32.totalorder %s33, %s49
    %p51 = scmp.eq.s32.totalorder %s25, 0
    %p52 = por %p50, %p51
    %s54 = sadd.s32 %s53, 1
    %p57 = scmp.eq.s32.totalorder %s19, 1
    %p58 = scmp.ne.s32.totalorder %s53, %s55
    %p59 = scmp.eq.s32.totalorder %s19, 0
    %p60 = por %p58, %p59
    %p61 = scmp.ne.s32.totalorder %s53, %s55
    %p62 = scmp.eq.s32.totalorder %s24, 1
    %p63 = por %p61, %p62
    %p64 = scmp.ne.s32.totalorder %s55, %s56
    %p65 = scmp.eq.s32.totalorder %s24, 0
    %p66 = por %p64, %p65
    %p67 = scmp.ne.s32.totalorder %s55, %s56
    %p68 = scmp.eq.s32.totalorder %s25, 1
    %p69 = por %p67, %p68
    %p71 = scmp.ne.s32.totalorder %s56, %s70
    %p72 = scmp.eq.s32.totalorder %s25, 0
    %p73 = por %p71, %p72
    %s75 = sadd.s32 %s74, 1
    %p78 = scmp.eq.s32.totalorder %s19, 1
    %p79 = scmp.ne.s32.totalorder %s74, %s76
    %p80 = scmp.eq.s32.totalorder %s19, 0
    %p81 = por %p79, %p80
    %p82 = scmp.ne.s32.totalorder %s74, %s76
    %p83 = scmp.eq.s32.totalorder %s24, 1
    %p84 = por %p82, %p83
    %p85 = scmp.ne.s32.totalorder %s76, %s77
    %p86 = scmp.eq.s32.totalorder %s24, 0
    %p87 = por %p85, %p86
    %p88 = scmp.ne.s32.totalorder %s76, %s77
    %p89 = scmp.eq.s32.totalorder %s25, 1
    %p90 = por %p88, %p89
    %p92 = scmp.ne.s32.totalorder %s77, %s91
    %p93 = scmp.eq.s32.totalorder %s25, 0
    %p94 = por %p92, %p93
    %s96 = sadd.s32 %s95, 1
    %p99 = scmp.eq.s32.totalorder %s19, 1
    %p100 = scmp.ne.s32.totalorder %s95, %s97
    %p101 = scmp.eq.s32.totalorder %s19, 0
    %p102 = por %p100, %p101
    %p103 = scmp.ne.s32.totalorder %s95, %s97
    %p104 = scmp.eq.s32.totalorder %s24, 1
    %p105 = por %p103, %p104
    %p106 = scmp.ne.s32.totalorder %s97, %s98
    %p107 = scmp.eq.s32.totalorder %s24, 0
    %p108 = por %p106, %p107
    %p109 = scmp.ne.s32.totalorder %s97, %s98
    %p110 = scmp.eq.s32.totalorder %s25, 1
    %p111 = por %p109, %p110
    %p113 = scmp.ne.s32.totalorder %s98, %s112
    %p114 = scmp.eq.s32.totalorder %s25, 0
    %p115 = por %p113, %p114
    %s117 = sadd.s32 %s116, 1
    %p120 = scmp.eq.s32.totalorder %s19, 1
    %p121 = scmp.ne.s32.totalorder %s116, %s118
    %p122 = scmp.eq.s32.totalorder %s19, 0
    %p123 = por %p121, %p122
    %p124 = scmp.ne.s32.totalorder %s116, %s118
    %p125 = scmp.eq.s32.totalorder %s24, 1
    %p126 = por %p124, %p125
    %p127 = scmp.ne.s32.totalorder %s118, %s119
    %p128 = scmp.eq.s32.totalorder %s24, 0
    %p129 = por %p127, %p128
    %p130 = scmp.ne.s32.totalorder %s118, %s119
    %p131 = scmp.eq.s32.totalorder %s25, 1
    %p132 = por %p130, %p131
    %p134 = scmp.ne.s32.totalorder %s119, %s133
    %p135 = scmp.eq.s32.totalorder %s25, 0
    %p136 = por %p134, %p135
    %s138 = sadd.s32 %s137, 1
    %p141 = scmp.eq.s32.totalorder %s19, 1
    %p142 = scmp.ne.s32.totalorder %s137, %s139
    %p143 = scmp.eq.s32.totalorder %s19, 0
    %p144 = por %p142, %p143
    %p145 = scmp.ne.s32.totalorder %s137, %s139
    %p146 = scmp.eq.s32.totalorder %s24, 1
    %p147 = por %p145, %p146
    %p148 = scmp.ne.s32.totalorder %s139, %s140
    %p149 = scmp.eq.s32.totalorder %s24, 0
    %p150 = por %p148, %p149
    %p151 = scmp.ne.s32.totalorder %s139, %s140
    %p152 = scmp.eq.s32.totalorder %s25, 1
    %p153 = por %p151, %p152
    %p155 = scmp.ne.s32.totalorder %s140, %s154
    %p156 = scmp.eq.s32.totalorder %s25, 0
    %p157 = por %p155, %p156
    %s159 = sadd.s32 %s158, 1
    %p162 = scmp.eq.s32.totalorder %s19, 1
    %p163 = scmp.ne.s32.totalorder %s158, %s160
    %p164 = scmp.eq.s32.totalorder %s19, 0
    %p165 = por %p163, %p164
    %p166 = scmp.ne.s32.totalorder %s158, %s160
    %p167 = scmp.eq.s32.totalorder %s24, 1
    %p168 = por %p166, %p167
    %p169 = scmp.ne.s32.totalorder %s160, %s161
    %p170 = scmp.eq.s32.totalorder %s24, 0
    %p171 = por %p169, %p170
    %p172 = scmp.ne.s32.totalorder %s160, %s161
    %p173 = scmp.eq.s32.totalorder %s25, 1
    %p174 = por %p172, %p173
    %p176 = scmp.ne.s32.totalorder %s161, %s175
    %p177 = scmp.eq.s32.totalorder %s25, 0
    %p178 = por %p176, %p177
    %s180 = sadd.s32 %s179, 1
    %p183 = scmp.eq.s32.totalorder %s19, 1
    %p184 = scmp.ne.s32.totalorder %s179, %s181
    %p185 = scmp.eq.s32.totalorder %s19, 0
    %p186 = por %p184, %p185
    %p187 = scmp.ne.s32.totalorder %s179, %s181
    %p188 = scmp.eq.s32.totalorder %s24, 1
    %p189 = por %p187, %p188
    %p190 = scmp.ne.s32.totalorder %s181, %s182
    %p191 = scmp.eq.s32.totalorder %s24, 0
    %p192 = por %p190, %p191
    %p193 = scmp.ne.s32.totalorder %s181, %s182
    %p194 = scmp.eq.s32.totalorder %s25, 1
    %p195 = por %p193, %p194
    %p197 = scmp.ne.s32.totalorder %s182, %s196
    %p198 = scmp.eq.s32.totalorder %s25, 0
    %p199 = por %p197, %p198
    %s201 = sadd.s32 %s200, 1
    %p204 = scmp.eq.s32.totalorder %s19, 1
    %p205 = scmp.ne.s32.totalorder %s200, %s202
    %p206 = scmp.eq.s32.totalorder %s19, 0
    %p207 = por %p205, %p206
    %p208 = scmp.ne.s32.totalorder %s200, %s202
    %p209 = scmp.eq.s32.totalorder %s24, 1
    %p210 = por %p208, %p209
    %p211 = scmp.ne.s32.totalorder %s202, %s203
    %p212 = scmp.eq.s32.totalorder %s24, 0
    %p213 = por %p211, %p212
    %p214 = scmp.ne.s32.totalorder %s202, %s203
    %p215 = scmp.eq.s32.totalorder %s25, 1
    %p216 = por %p214, %p215
    %p218 = scmp.ne.s32.totalorder %s203, %s217
    %p219 = scmp.eq.s32.totalorder %s25, 0
    %p220 = por %p218, %p219
    %s222 = sadd.s32 %s221, 1
    %p225 = scmp.eq.s32.totalorder %s19, 1
    %p226 = scmp.ne.s32.totalorder %s221, %s223
    %p227 = scmp.eq.s32.totalorder %s19, 0
    %p228 = por %p226, %p227
    %p229 = scmp.ne.s32.totalorder %s221, %s223
    %p230 = scmp.eq.s32.totalorder %s24, 1
    %p231 = por %p229, %p230
    %p232 = scmp.ne.s32.totalorder %s223, %s224
    %p233 = scmp.eq.s32.totalorder %s24, 0
    %p234 = por %p232, %p233
    %p235 = scmp.ne.s32.totalorder %s223, %s224
    %p236 = scmp.eq.s32.totalorder %s25, 1
    %p237 = por %p235, %p236
    %p239 = scmp.ne.s32.totalorder %s224, %s238
    %p240 = scmp.eq.s32.totalorder %s25, 0
    %p241 = por %p239, %p240
    %s243 = sadd.s32 %s242, 1
    %p246 = scmp.eq.s32.totalorder %s19, 1
    %p247 = scmp.ne.s32.totalorder %s242, %s244
    %p248 = scmp.eq.s32.totalorder %s19, 0
    %p249 = por %p247, %p248
    %p250 = scmp.ne.s32.totalorder %s242, %s244
    %p251 = scmp.eq.s32.totalorder %s24, 1
    %p252 = por %p250, %p251
    %p253 = scmp.ne.s32.totalorder %s244, %s245
    %p254 = scmp.eq.s32.totalorder %s24, 0
    %p255 = por %p253, %p254
    %p256 = scmp.ne.s32.totalorder %s244, %s245
    %p257 = scmp.eq.s32.totalorder %s25, 1
    %p258 = por %p256, %p257
    %p260 = scmp.ne.s32.totalorder %s245, %s259
    %p261 = scmp.eq.s32.totalorder %s25, 0
    %p262 = por %p260, %p261
    %s264 = sadd.s32 %s263, 1
    %p267 = scmp.eq.s32.totalorder %s19, 1
    %p268 = scmp.ne.s32.totalorder %s263, %s265
    %p269 = scmp.eq.s32.totalorder %s19, 0
    %p270 = por %p268, %p269
    %p271 = scmp.ne.s32.totalorder %s263, %s265
    %p272 = scmp.eq.s32.totalorder %s24, 1
    %p273 = por %p271, %p272
    %p274 = scmp.ne.s32.totalorder %s265, %s266
    %p275 = scmp.eq.s32.totalorder %s24, 0
    %p276 = por %p274, %p275
    %p277 = scmp.ne.s32.totalorder %s265, %s266
    %p278 = scmp.eq.s32.totalorder %s25, 1
    %p279 = por %p277, %p278
    %p281 = scmp.ne.s32.totalorder %s266, %s280
    %p282 = scmp.eq.s32.totalorder %s25, 0
    %p283 = por %p281, %p282
    %s285 = sadd.s32 %s284, 1
    %p288 = scmp.eq.s32.totalorder %s19, 1
    %p289 = scmp.ne.s32.totalorder %s284, %s286
    %p290 = scmp.eq.s32.totalorder %s19, 0
    %p291 = por %p289, %p290
    %p292 = scmp.ne.s32.totalorder %s284, %s286
    %p293 = scmp.eq.s32.totalorder %s24, 1
    %p294 = por %p292, %p293
    %p295 = scmp.ne.s32.totalorder %s286, %s287
    %p296 = scmp.eq.s32.totalorder %s24, 0
    %p297 = por %p295, %p296
    %p298 = scmp.ne.s32.totalorder %s286, %s287
    %p299 = scmp.eq.s32.totalorder %s25, 1
    %p300 = por %p298, %p299
    %p302 = scmp.ne.s32.totalorder %s287, %s301
    %p303 = scmp.eq.s32.totalorder %s25, 0
    %p304 = por %p302, %p303
    %s305 = ssub.s32 %s19, %s26
    %p306 = scmp.eq.s32.totalorder %s305, 0
    %s308 = sadd.s32 %s307, 1
    %s309 = scalar_select %p306, %s307, %s308
    %p312 = pneg %p306
    %p313 = scmp.eq.s32.totalorder %s19, 1
    %p314 = por %p312, %p313
    %p315 = scmp.ne.s32.totalorder %s307, %s310
    %p316 = scmp.eq.s32.totalorder %s19, 0
    %p317 = por %p315, %p316
    %p318 = scmp.ne.s32.totalorder %s307, %s310
    %p319 = scmp.eq.s32.totalorder %s24, 1
    %p320 = por %p318, %p319
    %p321 = scmp.ne.s32.totalorder %s310, %s311
    %p322 = scmp.eq.s32.totalorder %s24, 0
    %p323 = por %p321, %p322
    %p324 = scmp.ne.s32.totalorder %s310, %s311
    %p325 = scmp.eq.s32.totalorder %s25, 1
    %p326 = por %p324, %p325
    %p328 = scmp.ne.s32.totalorder %s311, %s327
    %p329 = scmp.eq.s32.totalorder %s25, 0
    %p330 = por %p328, %p329
    %p331 = scmp.le.s32.totalorder 1, %s19
    %p332 = scmp.lt.s32.totalorder %s19, 3
    %p333 = pnand %p331, %p332
    %p334 = pneg %p333
    // Predicated region
    $region9: #{slim_conv_forward.1} parent=5 // pred_check
      _
    $region10: #{slim_conv_forward.1} parent=5 // pred_check_branch
      %336 = sbr.rel (%p333) target = $region12
    $region11: #{slim_conv_forward.1} parent=5 // pred_region
      %s337 = ssub.s32 %s19, 1
      // Predicated region
      $region13: #{slim_conv_forward.1} parent=11 // pred_check
        %p338 = pneg %p66
      $region14: #{slim_conv_forward.1} parent=11 // pred_check_branch
        %340 = sbr.rel (%p338) target = $region16
      $region15: #{slim_conv_forward.1} parent=11 // pred_region
        _
      $region16: #{slim_conv_forward.1} parent=11 // pred_fallthru
        _
      // Predicated region
      $region17: #{slim_conv_forward.1} parent=11 // pred_check
        %p341 = pneg %p87
      $region18: #{slim_conv_forward.1} parent=11 // pred_check_branch
        %343 = sbr.rel (%p341) target = $region20
      $region19: #{slim_conv_forward.1} parent=11 // pred_region
        _
      $region20: #{slim_conv_forward.1} parent=11 // pred_fallthru
        _
      // Predicated region
      $region21: #{slim_conv_forward.1} parent=11 // pred_check
        %p344 = pneg %p108
      $region22: #{slim_conv_forward.1} parent=11 // pred_check_branch
        %346 = sbr.rel (%p344) target = $region24
      $region23: #{slim_conv_forward.1} parent=11 // pred_region
        _
      $region24: #{slim_conv_forward.1} parent=11 // pred_fallthru
        _
      // Predicated region
      $region25: #{slim_conv_forward.1} parent=11 // pred_check
        %p347 = pneg %p129
      $region26: #{slim_conv_forward.1} parent=11 // pred_check_branch
        %349 = sbr.rel (%p347) target = $region28
      $region27: #{slim_conv_forward.1} parent=11 // pred_region
        _
      $region28: #{slim_conv_forward.1} parent=11 // pred_fallthru
        _
      // Predicated region
      $region29: #{slim_conv_forward.1} parent=11 // pred_check
        %p350 = pneg %p150
      $region30: #{slim_conv_forward.1} parent=11 // pred_check_branch
        %352 = sbr.rel (%p350) target = $region32
      $region31: #{slim_conv_forward.1} parent=11 // pred_region
        _
      $region32: #{slim_conv_forward.1} parent=11 // pred_fallthru
        _
      // Predicated region
      $region33: #{slim_conv_forward.1} parent=11 // pred_check
        %p353 = pneg %p171
      $region34: #{slim_conv_forward.1} parent=11 // pred_check_branch
        %355 = sbr.rel (%p353) target = $region36
      $region35: #{slim_conv_forward.1} parent=11 // pred_region
        _
      $region36: #{slim_conv_forward.1} parent=11 // pred_fallthru
        _
      // Predicated region
      $region37: #{slim_conv_forward.1} parent=11 // pred_check
        %p356 = pneg %p192
      $region38: #{slim_conv_forward.1} parent=11 // pred_check_branch
        %358 = sbr.rel (%p356) target = $region40
      $region39: #{slim_conv_forward.1} parent=11 // pred_region
        _
      $region40: #{slim_conv_forward.1} parent=11 // pred_fallthru
        _
      // Predicated region
      $region41: #{slim_conv_forward.1} parent=11 // pred_check
        %p359 = pneg %p213
      $region42: #{slim_conv_forward.1} parent=11 // pred_check_branch
        %361 = sbr.rel (%p359) target = $region44
      $region43: #{slim_conv_forward.1} parent=11 // pred_region
        _
      $region44: #{slim_conv_forward.1} parent=11 // pred_fallthru
        _
      // Predicated region
      $region45: #{slim_conv_forward.1} parent=11 // pred_check
        %p362 = pneg %p234
      $region46: #{slim_conv_forward.1} parent=11 // pred_check_branch
        %364 = sbr.rel (%p362) target = $region48
      $region47: #{slim_conv_forward.1} parent=11 // pred_region
        _
      $region48: #{slim_conv_forward.1} parent=11 // pred_fallthru
        _
      // Predicated region
      $region49: #{slim_conv_forward.1} parent=11 // pred_check
        %p365 = pneg %p255
      $region50: #{slim_conv_forward.1} parent=11 // pred_check_branch
        %367 = sbr.rel (%p365) target = $region52
      $region51: #{slim_conv_forward.1} parent=11 // pred_region
        _
      $region52: #{slim_conv_forward.1} parent=11 // pred_fallthru
        _
      // Predicated region
      $region53: #{slim_conv_forward.1} parent=11 // pred_check
        %p368 = pneg %p276
      $region54: #{slim_conv_forward.1} parent=11 // pred_check_branch
        %370 = sbr.rel (%p368) target = $region56
      $region55: #{slim_conv_forward.1} parent=11 // pred_region
        _
      $region56: #{slim_conv_forward.1} parent=11 // pred_fallthru
        _
      // Predicated region
      $region57: #{slim_conv_forward.1} parent=11 // pred_check
        %p371 = pneg %p297
      $region58: #{slim_conv_forward.1} parent=11 // pred_check_branch
        %373 = sbr.rel (%p371) target = $region60
      $region59: #{slim_conv_forward.1} parent=11 // pred_region
        _
      $region60: #{slim_conv_forward.1} parent=11 // pred_fallthru
        _
    $region12: #{slim_conv_forward.1} parent=5 // pred_fallthru
      _
    %p374 = scmp.lt.s32.totalorder %s19, 2
    // Predicated region
    $region61: #{slim_conv_forward.1} parent=5 // pred_check
      %p375 = pneg %p374
    $region62: #{slim_conv_forward.1} parent=5 // pred_check_branch
      %377 = sbr.rel (%p375) target = $region64
    $region63: #{slim_conv_forward.1} parent=5 // pred_region
      // Predicated region
      $region65: #{slim_conv_forward.1} parent=63 // pred_check
        %p378 = pneg %p39
      $region66: #{slim_conv_forward.1} parent=63 // pred_check_branch
        %380 = sbr.rel (%p378) target = $region68
      $region67: #{slim_conv_forward.1} parent=63 // pred_region
        %p381 = scmp.lt.s32.totalorder %s19, 1
        %s382 = scalar_select %p381, %s19, 1
        %s383 = smul.addr %s382, 2
        %s384 = smul.addr %s383, 8
        %s385 = scalar_lea.vmem %s0, %s384
      $region68: #{slim_conv_forward.1} parent=63 // pred_fallthru
        _
    $region64: #{slim_conv_forward.1} parent=5 // pred_fallthru
      _
    %p386 = scmp.le.s32.totalorder 1, %s19
    %p387 = scmp.lt.s32.totalorder %s19, 3
    %p388 = pnand %p386, %p387
    %p389 = pneg %p388
    // Predicated region
    $region69: #{slim_conv_forward.1} parent=5 // pred_check
      _
    $region70: #{slim_conv_forward.1} parent=5 // pred_check_branch
      %391 = sbr.rel (%p388) target = $region72
    $region71: #{slim_conv_forward.1} parent=5 // pred_region
      %s392 = ssub.s32 %s19, 1
      %p393 = scmp.lt.s32.totalorder %s24, 1
      %s394 = scalar_select %p393, %s24, 1
      %s395 = smul.addr %s394, 2
      %s396 = smul.addr %s395, 8
      %s397 = scalar_lea.vmem %s0, %s396
      %p398 = pneg %p45
      %p399 = pneg %p42
      %p400 = pneg %p66
      %p401 = pneg %p63
      %p402 = pneg %p87
      %p403 = pneg %p84
      %p404 = pneg %p108
      %p405 = pneg %p105
      %p406 = pneg %p129
      %p407 = pneg %p126
      %p408 = pneg %p150
      %p409 = pneg %p147
      %p410 = pneg %p171
      %p411 = pneg %p168
      %p412 = pneg %p192
      %p413 = pneg %p189
      %p414 = pneg %p213
      %p415 = pneg %p210
      %p416 = pneg %p234
      %p417 = pneg %p231
      %p418 = pneg %p255
      %p419 = pneg %p252
      %p420 = pneg %p276
      %p421 = pneg %p273
      %p422 = pneg %p297
      %p423 = pneg %p294
      %p424 = pneg %p323
      %p425 = pneg %p320
      %p426 = scmp.lt.s32.totalorder %s24, 1
      %s427 = scalar_select %p426, %s24, 1
      %s428 = smul.addr %s427, 2
      %s429 = smul.addr %s428, 8
      %s430 = scalar_lea.vmem %s13, %s429
      %p431 = scmp.lt.s32.totalorder %s24, 1
      %s432 = scalar_select %p431, %s24, 1
      %s433 = smul.addr %s432, 2
      %s434 = smul.addr %s433, 8
      %s435 = scalar_lea.vmem %s0, %s434
      %p436 = scmp.lt.s32.totalorder %s24, 1
      %s437 = scalar_select %p436, %s24, 1
      %s438 = smul.addr %s437, 2
      %s439 = smul.addr %s438, 8
      %s440 = scalar_lea.vmem %s13, %s439
      %v442 = vld [vmem:[%s435] sm:$0xff]
      %v443 = vld [vmem:[%s435 + $0x8] sm:$0xff]
      %v444 = vadd.f32 %v442, %v443
      %445 = vadd.xlane.f32.xlu0 %v444
      %v446 = vpop.xlane.xlu0 %445
      %v447 = vld [vmem:[%s1] sm:$0xf]
      %v448 = vld [vmem:[%s2] sm:$0xf]
      %vm449 = vcmask 64512
      %v451 = vsel %vm449, %v447, 0
      %453 = vmatpush.msra.mxu0 0.0
      %454 = vmatpush.msra.mxu0 0.0
      %455 = vmatpush.msra.mxu0 0.0
      %456 = vmatpush.msra.mxu0 0.0
      %457 = vmatpush.msra.mxu0 0.0
      %458 = vmatpush.msra.mxu0 0.0
      %459 = vmatpush.msra.mxu0 0.0
      %460 = vmatpush.msra.mxu0 0.0
      %461 = vmatpush.msra.mxu0 0.0
      %462 = vmatpush.msra.mxu0 0.0
      %463 = vmatpush.msra.mxu0 0.0
      %464 = vmatpush.msra.mxu0 0.0
      %465 = vmatpush.msra.mxu0 0.0
      %466 = vmatpush.msra.mxu0 0.0
      %467 = vmatpush.msra.mxu0 0.0
      %468 = vmatpush.msra.mxu0 %v446
      %469 = vmatmul.f32.gmra.mxu0 %v451
      %v470 = vpop.f32.mrf.mxu0
      %v471 = vadd.f32 %v448, %v470
      %472 = vdwg.mxu0
      %v473 = vmax.f32 %v471, 0.0
      %v474 = vld [vmem:[%s3] sm:$0xff]
      %v475 = vld [vmem:[%s4] sm:$0xff]
      %vm476 = vcmask 31744
      %v478 = vsel %vm476, %v474, 0
      %vm480 = vcmask 1043456
      %v482 = vsel %vm480, %v473, 0
      %484 = vmatpush.msra.mxu0 0.0
      %485 = vmatpush.msra.mxu0 0.0
      %486 = vmatpush.msra.mxu0 0.0
      %487 = vmatpush.msra.mxu0 0.0
      %488 = vmatpush.msra.mxu0 0.0
      %489 = vmatpush.msra.mxu0 0.0
      %490 = vmatpush.msra.mxu0 0.0
      %491 = vmatpush.msra.mxu0 0.0
      %492 = vmatpush.msra.mxu0 0.0
      %493 = vmatpush.msra.mxu0 0.0
      %494 = vmatpush.msra.mxu0 0.0
      %495 = vmatpush.msra.mxu0 0.0
      %496 = vmatpush.msra.mxu0 0.0
      %497 = vmatpush.msra.mxu0 0.0
      %498 = vmatpush.msra.mxu0 0.0
      %499 = vmatpush.msra.mxu0 %v482
      %500 = vmatmul.f32.gmra.mxu0 %v478
      %v501 = vpop.f32.mrf.mxu0
      %v502 = vadd.f32 %v475, %v501
      %503 = vdwg.mxu0
      %v504 = vld [vmem:[%s5] sm:$0xff]
      %v505 = vld [vmem:[%s6] sm:$0xff]
      %v507 = vsel %vm476, %v504, 0
      %509 = vmatpush.msra.mxu0 0.0
      %510 = vmatpush.msra.mxu0 0.0
      %511 = vmatpush.msra.mxu0 0.0
      %512 = vmatpush.msra.mxu0 0.0
      %513 = vmatpush.msra.mxu0 0.0
      %514 = vmatpush.msra.mxu0 0.0
      %515 = vmatpush.msra.mxu0 0.0
      %516 = vmatpush.msra.mxu0 0.0
      %517 = vmatpush.msra.mxu0 0.0
      %518 = vmatpush.msra.mxu0 0.0
      %519 = vmatpush.msra.mxu0 0.0
      %520 = vmatpush.msra.mxu0 0.0
      %521 = vmatpush.msra.mxu0 0.0
      %522 = vmatpush.msra.mxu0 0.0
      %523 = vmatpush.msra.mxu0 0.0
      %524 = vmatpush.msra.mxu0 %v482
      %525 = vmatmul.f32.gmra.mxu0 %v507
      %v526 = vpop.f32.mrf.mxu0
      %v527 = vadd.f32 %v505, %v526
      %528 = vdwg.mxu0
      %v529 = vsub.f32 0.0, %v502
      %v530 = vmul.f32 %v529, 1.442695
      %v531 = vpow.pop %v530
      %v532 = vadd.f32 %v531, 1.0
      %v533 = vrcp.pop %v532
      %v534 = vmul.f32 %v532, %v533
      %v535 = vsub.f32 1.0, %v534
      %v536 = vmul.f32 %v533, %v535
      %v537 = vadd.f32 %v533, %v536
      %vm538 = vweird.f32 %v532
      %vm539 = vweird.f32 %v533
      %vm540 = vmor %vm538, %vm539
      %v541 = vsel %vm540, %v533, %v537
      %v542 = vand.u32 2147483647, %v532
      %vm543 = vcmp.eq.f32.partialorder %v542, 8.507059e+37
      %v544 = vand.u32 %v532, 2147483648
      %v545 = vor.u32 1.1754944e-38, %v544
      %v546 = vsel %vm543, %v545, %v541
      %v547 = vmul.f32 1.0, %v546
      %v548 = vsub.f32 0.0, %v527
      %v549 = vmul.f32 %v548, 1.442695
      %v550 = vpow.pop %v549
      %v551 = vadd.f32 %v550, 1.0
      %v552 = vrcp.pop %v551
      %v553 = vmul.f32 %v551, %v552
      %v554 = vsub.f32 1.0, %v553
      %v555 = vmul.f32 %v552, %v554
      %v556 = vadd.f32 %v552, %v555
      %vm557 = vweird.f32 %v551
      %vm558 = vweird.f32 %v552
      %vm559 = vmor %vm557, %vm558
      %v560 = vsel %vm559, %v552, %v556
      %v561 = vand.u32 2147483647, %v551
      %vm562 = vcmp.eq.f32.partialorder %v561, 8.507059e+37
      %v563 = vand.u32 %v551, 2147483648
      %v564 = vor.u32 1.1754944e-38, %v563
      %v565 = vsel %vm562, %v564, %v560
      %v566 = vmul.f32 1.0, %v565
      %568 = vset.pattern.permute.xlu0 0
      %569 = vperm.xlu0 %568, %v547
      %v570 = vpop.permute.xlu0 %569
      %v572 = vmul.f32 %v442, %v570
      %v573 = vmul.f32 %v443, %v570
      %575 = vset.pattern.permute.xlu0 0
      %576 = vperm.xlu0 %575, %v566
      %v577 = vpop.permute.xlu0 %576
      %v579 = vmul.f32 %v442, %v577
      %v580 = vmul.f32 %v443, %v577
      %v583 = vrot.slane %v572, 4
      %v584 = vrot.slane %v573, 4
      %v587 = vadd.f32 %v572, %v583
      %v588 = vadd.f32 %v573, %v584
      %v591 = vrot.slane %v579, 4
      %v592 = vrot.slane %v580, 4
      %v595 = vadd.f32 %v579, %v591
      %v596 = vadd.f32 %v580, %v592
      %v597 = vpack.c.bf16 %v587, %v587
      %v598 = vpack.c.bf16 %v588, %v588
      %v599 = vld [vmem:[%s7] sm:$0x3]
      %s600 = scalar_lea.vmem %s7, 2
      %v601 = vld [vmem:[%s600] sm:$0x3]
      %604 = vrot.lane.b32.xlu0 %v597, 127
      %v605 = vpop.permute.xlu0 %604
      %606 = vrot.lane.b32.xlu0 %v598, 127
      %v607 = vpop.permute.xlu0 %606
      %vm608 = vcmask 1039360
      %v609 = vsel %vm608, %v605, %v607
      %v611 = vsel %vm476, %v601, 0
      %vm613 = vcmask 1041408
      %v615 = vsel %vm613, %v609, 0
      %v618 = vsel %vm613, %v607, 0
      %620 = vmatpush.bf16.msra.mxu0 0
      %621 = vmatpush.bf16.msra.mxu0 0
      %622 = vmatpush.bf16.msra.mxu0 0
      %623 = vmatpush.bf16.msra.mxu0 0
      %624 = vmatpush.bf16.msra.mxu0 0
      %625 = vmatpush.bf16.msra.mxu0 0
      %626 = vmatpush.bf16.msra.mxu0 0
      %627 = vmatpush.bf16.msra.mxu0 %v615
      %628 = vmatmul.bf16.gmra.mxu0 %v611
      %v629 = vpop.f32.mrf.mxu0
      %v630 = vadd.f32 0.0, %v629
      %v631 = vpop.f32.mrf.mxu0
      %632 = vdwg.mxu0
      %633 = vmatpush.bf16.msra.mxu0 0
      %634 = vmatpush.bf16.msra.mxu0 0
      %635 = vmatpush.bf16.msra.mxu0 0
      %636 = vmatpush.bf16.msra.mxu0 0
      %637 = vmatpush.bf16.msra.mxu0 0
      %638 = vmatpush.bf16.msra.mxu0 0
      %639 = vmatpush.bf16.msra.mxu0 0
      %640 = vmatpush.bf16.msra.mxu0 %v618
      %641 = vmatmul.bf16.gmra.mxu0 %v611
      %v642 = vpop.f32.mrf.mxu0
      %v643 = vadd.f32 0.0, %v642
      %v644 = vpop.f32.mrf.mxu0
      %645 = vdwg.mxu0
      %v647 = vsel %vm476, %v599, 0
      %v650 = vsel %vm613, %v597, 0
      %v653 = vsel %vm613, %v598, 0
      %655 = vmatpush.bf16.msra.mxu0 0
      %656 = vmatpush.bf16.msra.mxu0 0
      %657 = vmatpush.bf16.msra.mxu0 0
      %658 = vmatpush.bf16.msra.mxu0 0
      %659 = vmatpush.bf16.msra.mxu0 0
      %660 = vmatpush.bf16.msra.mxu0 0
      %661 = vmatpush.bf16.msra.mxu0 0
      %662 = vmatpush.bf16.msra.mxu0 %v650
      %663 = vmatmul.bf16.gmra.mxu0 %v647
      %v664 = vpop.f32.mrf.mxu0
      %v665 = vadd.f32 %v630, %v664
      %v666 = vpop.f32.mrf.mxu0
      %667 = vdwg.mxu0
      %668 = vmatpush.bf16.msra.mxu0 0
      %669 = vmatpush.bf16.msra.mxu0 0
      %670 = vmatpush.bf16.msra.mxu0 0
      %671 = vmatpush.bf16.msra.mxu0 0
      %672 = vmatpush.bf16.msra.mxu0 0
      %673 = vmatpush.bf16.msra.mxu0 0
      %674 = vmatpush.bf16.msra.mxu0 0
      %675 = vmatpush.bf16.msra.mxu0 %v653
      %676 = vmatmul.bf16.gmra.mxu0 %v647
      %v677 = vpop.f32.mrf.mxu0
      %v678 = vadd.f32 %v643, %v677
      %v679 = vpop.f32.mrf.mxu0
      %680 = vdwg.mxu0
      %s681 = scalar_lea.vmem %s7, 4
      %v682 = vld [vmem:[%s681] sm:$0x3]
      %683 = vrot.lane.b32.xlu0 %v597, 126
      %v684 = vpop.permute.xlu0 %683
      %685 = vrot.lane.b32.xlu0 %v598, 126
      %v686 = vpop.permute.xlu0 %685
      %vm687 = vcmask 1031168
      %v688 = vsel %vm687, %v684, %v686
      %v690 = vsel %vm476, %v682, 0
      %v693 = vsel %vm613, %v688, 0
      %v696 = vsel %vm613, %v686, 0
      %698 = vmatpush.bf16.msra.mxu0 0
      %699 = vmatpush.bf16.msra.mxu0 0
      %700 = vmatpush.bf16.msra.mxu0 0
      %701 = vmatpush.bf16.msra.mxu0 0
      %702 = vmatpush.bf16.msra.mxu0 0
      %703 = vmatpush.bf16.msra.mxu0 0
      %704 = vmatpush.bf16.msra.mxu0 0
      %705 = vmatpush.bf16.msra.mxu0 %v693
      %706 = vmatmul.bf16.gmra.mxu0 %v690
      %v707 = vpop.f32.mrf.mxu0
      %v708 = vadd.f32 0.0, %v707
      %v709 = vpop.f32.mrf.mxu0
      %710 = vdwg.mxu0
      %711 = vmatpush.bf16.msra.mxu0 0
      %712 = vmatpush.bf16.msra.mxu0 0
      %713 = vmatpush.bf16.msra.mxu0 0
      %714 = vmatpush.bf16.msra.mxu0 0
      %715 = vmatpush.bf16.msra.mxu0 0
      %716 = vmatpush.bf16.msra.mxu0 0
      %717 = vmatpush.bf16.msra.mxu0 0
      %718 = vmatpush.bf16.msra.mxu0 %v696
      %719 = vmatmul.bf16.gmra.mxu0 %v690
      %v720 = vpop.f32.mrf.mxu0
      %v721 = vadd.f32 0.0, %v720
      %v722 = vpop.f32.mrf.mxu0
      %723 = vdwg.mxu0
      %v724 = vadd.f32 %v665, %v708
      %v725 = vadd.f32 %v678, %v721
      %s726 = scalar_lea.vmem %s7, 6
      %v727 = vld [vmem:[%s726] sm:$0x3]
      %728 = vrot.lane.b32.xlu0 %v597, 112
      %v729 = vpop.permute.xlu0 %728
      %730 = vrot.lane.b32.xlu0 %v598, 112
      %v731 = vpop.permute.xlu0 %730
      %vm732 = vcmask 916480
      %v733 = vsel %vm732, %v729, %v731
      %v735 = vsel %vm476, %v727, 0
      %v738 = vsel %vm613, %v733, 0
      %v741 = vsel %vm613, %v731, 0
      %743 = vmatpush.bf16.msra.mxu0 0
      %744 = vmatpush.bf16.msra.mxu0 0
      %745 = vmatpush.bf16.msra.mxu0 0
      %746 = vmatpush.bf16.msra.mxu0 0
      %747 = vmatpush.bf16.msra.mxu0 0
      %748 = vmatpush.bf16.msra.mxu0 0
      %749 = vmatpush.bf16.msra.mxu0 0
      %750 = vmatpush.bf16.msra.mxu0 %v738
      %751 = vmatmul.bf16.gmra.mxu0 %v735
      %v752 = vpop.f32.mrf.mxu0
      %v753 = vadd.f32 0.0, %v752
      %v754 = vpop.f32.mrf.mxu0
      %755 = vdwg.mxu0
      %756 = vmatpush.bf16.msra.mxu0 0
      %757 = vmatpush.bf16.msra.mxu0 0
      %758 = vmatpush.bf16.msra.mxu0 0
      %759 = vmatpush.bf16.msra.mxu0 0
      %760 = vmatpush.bf16.msra.mxu0 0
      %761 = vmatpush.bf16.msra.mxu0 0
      %762 = vmatpush.bf16.msra.mxu0 0
      %763 = vmatpush.bf16.msra.mxu0 %v741
      %764 = vmatmul.bf16.gmra.mxu0 %v735
      %v765 = vpop.f32.mrf.mxu0
      %v766 = vadd.f32 0.0, %v765
      %v767 = vpop.f32.mrf.mxu0
      %768 = vdwg.mxu0
      %v769 = vadd.f32 %v724, %v753
      %v770 = vadd.f32 %v725, %v766
      %s771 = scalar_lea.vmem %s7, 8
      %v772 = vld [vmem:[%s771] sm:$0x3]
      %773 = vrot.lane.b32.xlu0 %v597, 111
      %v774 = vpop.permute.xlu0 %773
      %775 = vrot.lane.b32.xlu0 %v598, 111
      %v776 = vpop.permute.xlu0 %775
      %vm777 = vcmask 908288
      %v778 = vsel %vm777, %v774, %v776
      %v780 = vsel %vm476, %v772, 0
      %v783 = vsel %vm613, %v778, 0
      %v786 = vsel %vm613, %v776, 0
      %788 = vmatpush.bf16.msra.mxu0 0
      %789 = vmatpush.bf16.msra.mxu0 0
      %790 = vmatpush.bf16.msra.mxu0 0
      %791 = vmatpush.bf16.msra.mxu0 0
      %792 = vmatpush.bf16.msra.mxu0 0
      %793 = vmatpush.bf16.msra.mxu0 0
      %794 = vmatpush.bf16.msra.mxu0 0
      %795 = vmatpush.bf16.msra.mxu0 %v783
      %796 = vmatmul.bf16.gmra.mxu0 %v780
      %v797 = vpop.f32.mrf.mxu0
      %v798 = vadd.f32 0.0, %v797
      %v799 = vpop.f32.mrf.mxu0
      %800 = vdwg.mxu0
      %801 = vmatpush.bf16.msra.mxu0 0
      %802 = vmatpush.bf16.msra.mxu0 0
      %803 = vmatpush.bf16.msra.mxu0 0
      %804 = vmatpush.bf16.msra.mxu0 0
      %805 = vmatpush.bf16.msra.mxu0 0
      %806 = vmatpush.bf16.msra.mxu0 0
      %807 = vmatpush.bf16.msra.mxu0 0
      %808 = vmatpush.bf16.msra.mxu0 %v786
      %809 = vmatmul.bf16.gmra.mxu0 %v780
      %v810 = vpop.f32.mrf.mxu0
      %v811 = vadd.f32 0.0, %v810
      %v812 = vpop.f32.mrf.mxu0
      %813 = vdwg.mxu0
      %v814 = vadd.f32 %v769, %v798
      %v815 = vadd.f32 %v770, %v811
      %s816 = scalar_lea.vmem %s7, 10
      %v817 = vld [vmem:[%s816] sm:$0x3]
      %818 = vrot.lane.b32.xlu0 %v597, 110
      %v819 = vpop.permute.xlu0 %818
      %820 = vrot.lane.b32.xlu0 %v598, 110
      %v821 = vpop.permute.xlu0 %820
      %vm822 = vcmask 900096
      %v823 = vsel %vm822, %v819, %v821
      %v825 = vsel %vm476, %v817, 0
      %v828 = vsel %vm613, %v823, 0
      %v831 = vsel %vm613, %v821, 0
      %833 = vmatpush.bf16.msra.mxu0 0
      %834 = vmatpush.bf16.msra.mxu0 0
      %835 = vmatpush.bf16.msra.mxu0 0
      %836 = vmatpush.bf16.msra.mxu0 0
      %837 = vmatpush.bf16.msra.mxu0 0
      %838 = vmatpush.bf16.msra.mxu0 0
      %839 = vmatpush.bf16.msra.mxu0 0
      %840 = vmatpush.bf16.msra.mxu0 %v828
      %841 = vmatmul.bf16.gmra.mxu0 %v825
      %v842 = vpop.f32.mrf.mxu0
      %v843 = vadd.f32 0.0, %v842
      %v844 = vpop.f32.mrf.mxu0
      %845 = vdwg.mxu0
      %846 = vmatpush.bf16.msra.mxu0 0
      %847 = vmatpush.bf16.msra.mxu0 0
      %848 = vmatpush.bf16.msra.mxu0 0
      %849 = vmatpush.bf16.msra.mxu0 0
      %850 = vmatpush.bf16.msra.mxu0 0
      %851 = vmatpush.bf16.msra.mxu0 0
      %852 = vmatpush.bf16.msra.mxu0 0
      %853 = vmatpush.bf16.msra.mxu0 %v831
      %854 = vmatmul.bf16.gmra.mxu0 %v825
      %v855 = vpop.f32.mrf.mxu0
      %v856 = vadd.f32 0.0, %v855
      %v857 = vpop.f32.mrf.mxu0
      %858 = vdwg.mxu0
      %v859 = vadd.f32 %v814, %v843
      %v860 = vadd.f32 %v815, %v856
      %s861 = scalar_lea.vmem %s7, 12
      %v862 = vld [vmem:[%s861] sm:$0x3]
      %863 = vrot.lane.b32.xlu0 %v597, 96
      %v864 = vpop.permute.xlu0 %863
      %865 = vrot.lane.b32.xlu0 %v598, 96
      %v866 = vpop.permute.xlu0 %865
      %vm867 = vcmask 785408
      %v868 = vsel %vm867, %v864, %v866
      %v870 = vsel %vm476, %v862, 0
      %v873 = vsel %vm613, %v868, 0
      %v876 = vsel %vm613, %v866, 0
      %878 = vmatpush.bf16.msra.mxu0 0
      %879 = vmatpush.bf16.msra.mxu0 0
      %880 = vmatpush.bf16.msra.mxu0 0
      %881 = vmatpush.bf16.msra.mxu0 0
      %882 = vmatpush.bf16.msra.mxu0 0
      %883 = vmatpush.bf16.msra.mxu0 0
      %884 = vmatpush.bf16.msra.mxu0 0
      %885 = vmatpush.bf16.msra.mxu0 %v873
      %886 = vmatmul.bf16.gmra.mxu0 %v870
      %v887 = vpop.f32.mrf.mxu0
      %v888 = vadd.f32 0.0, %v887
      %v889 = vpop.f32.mrf.mxu0
      %890 = vdwg.mxu0
      %891 = vmatpush.bf16.msra.mxu0 0
      %892 = vmatpush.bf16.msra.mxu0 0
      %893 = vmatpush.bf16.msra.mxu0 0
      %894 = vmatpush.bf16.msra.mxu0 0
      %895 = vmatpush.bf16.msra.mxu0 0
      %896 = vmatpush.bf16.msra.mxu0 0
      %897 = vmatpush.bf16.msra.mxu0 0
      %898 = vmatpush.bf16.msra.mxu0 %v876
      %899 = vmatmul.bf16.gmra.mxu0 %v870
      %v900 = vpop.f32.mrf.mxu0
      %v901 = vadd.f32 0.0, %v900
      %v902 = vpop.f32.mrf.mxu0
      %903 = vdwg.mxu0
      %v904 = vadd.f32 %v859, %v888
      %v905 = vadd.f32 %v860, %v901
      %s906 = scalar_lea.vmem %s7, 14
      %v907 = vld [vmem:[%s906] sm:$0x3]
      %908 = vrot.lane.b32.xlu0 %v597, 95
      %v909 = vpop.permute.xlu0 %908
      %910 = vrot.lane.b32.xlu0 %v598, 95
      %v911 = vpop.permute.xlu0 %910
      %vm912 = vcmask 777216
      %v913 = vsel %vm912, %v909, %v911
      %v915 = vsel %vm476, %v907, 0
      %v918 = vsel %vm613, %v913, 0
      %v921 = vsel %vm613, %v911, 0
      %923 = vmatpush.bf16.msra.mxu0 0
      %924 = vmatpush.bf16.msra.mxu0 0
      %925 = vmatpush.bf16.msra.mxu0 0
      %926 = vmatpush.bf16.msra.mxu0 0
      %927 = vmatpush.bf16.msra.mxu0 0
      %928 = vmatpush.bf16.msra.mxu0 0
      %929 = vmatpush.bf16.msra.mxu0 0
      %930 = vmatpush.bf16.msra.mxu0 %v918
      %931 = vmatmul.bf16.gmra.mxu0 %v915
      %v932 = vpop.f32.mrf.mxu0
      %v933 = vadd.f32 0.0, %v932
      %v934 = vpop.f32.mrf.mxu0
      %935 = vdwg.mxu0
      %936 = vmatpush.bf16.msra.mxu0 0
      %937 = vmatpush.bf16.msra.mxu0 0
      %938 = vmatpush.bf16.msra.mxu0 0
      %939 = vmatpush.bf16.msra.mxu0 0
      %940 = vmatpush.bf16.msra.mxu0 0
      %941 = vmatpush.bf16.msra.mxu0 0
      %942 = vmatpush.bf16.msra.mxu0 0
      %943 = vmatpush.bf16.msra.mxu0 %v921
      %944 = vmatmul.bf16.gmra.mxu0 %v915
      %v945 = vpop.f32.mrf.mxu0
      %v946 = vadd.f32 0.0, %v945
      %v947 = vpop.f32.mrf.mxu0
      %948 = vdwg.mxu0
      %v949 = vadd.f32 %v904, %v933
      %v950 = vadd.f32 %v905, %v946
      %s951 = scalar_lea.vmem %s7, 16
      %v952 = vld [vmem:[%s951] sm:$0x3]
      %953 = vrot.lane.b32.xlu0 %v597, 94
      %v954 = vpop.permute.xlu0 %953
      %955 = vrot.lane.b32.xlu0 %v598, 94
      %v956 = vpop.permute.xlu0 %955
      %vm957 = vcmask 769024
      %v958 = vsel %vm957, %v954, %v956
      %v960 = vsel %vm476, %v952, 0
      %v963 = vsel %vm613, %v958, 0
      %v966 = vsel %vm613, %v956, 0
      %968 = vmatpush.bf16.msra.mxu0 0
      %969 = vmatpush.bf16.msra.mxu0 0
      %970 = vmatpush.bf16.msra.mxu0 0
      %971 = vmatpush.bf16.msra.mxu0 0
      %972 = vmatpush.bf16.msra.mxu0 0
      %973 = vmatpush.bf16.msra.mxu0 0
      %974 = vmatpush.bf16.msra.mxu0 0
      %975 = vmatpush.bf16.msra.mxu0 %v963
      %976 = vmatmul.bf16.gmra.mxu0 %v960
      %v977 = vpop.f32.mrf.mxu0
      %v978 = vadd.f32 0.0, %v977
      %v979 = vpop.f32.mrf.mxu0
      %980 = vdwg.mxu0
      %981 = vmatpush.bf16.msra.mxu0 0
      %982 = vmatpush.bf16.msra.mxu0 0
      %983 = vmatpush.bf16.msra.mxu0 0
      %984 = vmatpush.bf16.msra.mxu0 0
      %985 = vmatpush.bf16.msra.mxu0 0
      %986 = vmatpush.bf16.msra.mxu0 0
      %987 = vmatpush.bf16.msra.mxu0 0
      %988 = vmatpush.bf16.msra.mxu0 %v966
      %989 = vmatmul.bf16.gmra.mxu0 %v960
      %v990 = vpop.f32.mrf.mxu0
      %v991 = vadd.f32 0.0, %v990
      %v992 = vpop.f32.mrf.mxu0
      %993 = vdwg.mxu0
      %v994 = vadd.f32 %v949, %v978
      %v995 = vadd.f32 %v950, %v991
      %v996 = vld [vmem:[%s8] sm:$0xf]
      %998 = vset.pattern.permute.xlu0 0
      %999 = vperm.xlu0 %998, %v996
      %v1000 = vpop.permute.xlu0 %999
      %v1002 = vadd.f32 %v994, %v1000
      %v1003 = vadd.f32 %v995, %v1000
      %v1004 = vld [vmem:[%s9] sm:$0x3]
      %v1005 = vpack.c.bf16 %v595, %v595
      %v1006 = vpack.c.bf16 %v596, %v596
      %v1007 = vld [vmem:[%s10] sm:$0xf]
      %1009 = vset.pattern.permute.xlu0 0
      %1010 = vperm.xlu0 %1009, %v1007
      %v1011 = vpop.permute.xlu0 %1010
      %v1014 = vsel %vm476, %v1004, 0
      %v1017 = vsel %vm613, %v1005, 0
      %v1020 = vsel %vm613, %v1006, 0
      %1022 = vmatpush.bf16.msra.mxu0 0
      %1023 = vmatpush.bf16.msra.mxu0 0
      %1024 = vmatpush.bf16.msra.mxu0 0
      %1025 = vmatpush.bf16.msra.mxu0 0
      %1026 = vmatpush.bf16.msra.mxu0 0
      %1027 = vmatpush.bf16.msra.mxu0 0
      %1028 = vmatpush.bf16.msra.mxu0 0
      %1029 = vmatpush.bf16.msra.mxu0 %v1017
      %1030 = vmatmul.bf16.gmra.mxu0 %v1014
      %v1031 = vpop.f32.mrf.mxu0
      %v1032 = vadd.f32 %v1011, %v1031
      %v1033 = vpop.f32.mrf.mxu0
      %1034 = vdwg.mxu0
      %1035 = vmatpush.bf16.msra.mxu0 0
      %1036 = vmatpush.bf16.msra.mxu0 0
      %1037 = vmatpush.bf16.msra.mxu0 0
      %1038 = vmatpush.bf16.msra.mxu0 0
      %1039 = vmatpush.bf16.msra.mxu0 0
      %1040 = vmatpush.bf16.msra.mxu0 0
      %1041 = vmatpush.bf16.msra.mxu0 0
      %1042 = vmatpush.bf16.msra.mxu0 %v1020
      %1043 = vmatmul.bf16.gmra.mxu0 %v1014
      %v1044 = vpop.f32.mrf.mxu0
      %v1045 = vadd.f32 %v1011, %v1044
      %v1046 = vpop.f32.mrf.mxu0
      %1047 = vdwg.mxu0
      %v1048 = vmax.f32 %v1032, 0.0
      %v1049 = vmax.f32 %v1045, 0.0
      %v1050 = vpack.c.bf16 %v1048, %v1048
      %v1051 = vpack.c.bf16 %v1049, %v1049
      %v1052 = vld [vmem:[%s11] sm:$0x1]
      %s1053 = scalar_lea.vmem %s11, 1
      %v1054 = vld [vmem:[%s1053] sm:$0x1]
      %1057 = vrot.lane.b32.xlu0 %v1050, 127
      %v1058 = vpop.permute.xlu0 %1057
      %1059 = vrot.lane.b32.xlu0 %v1051, 127
      %v1060 = vpop.permute.xlu0 %1059
      %v1061 = vsel %vm608, %v1058, %v1060
      %v1063 = vsel %vm476, %v1054, 0
      %v1066 = vsel %vm613, %v1061, 0
      %v1069 = vsel %vm613, %v1060, 0
      %1071 = vmatpush.bf16.msra.mxu0 0
      %1072 = vmatpush.bf16.msra.mxu0 0
      %1073 = vmatpush.bf16.msra.mxu0 0
      %1074 = vmatpush.bf16.msra.mxu0 0
      %1075 = vmatpush.bf16.msra.mxu0 0
      %1076 = vmatpush.bf16.msra.mxu0 0
      %1077 = vmatpush.bf16.msra.mxu0 0
      %1078 = vmatpush.bf16.msra.mxu0 %v1066
      %1079 = vmatmul.bf16.gmra.mxu0 %v1063
      %v1080 = vpop.f32.mrf.mxu0
      %v1081 = vadd.f32 0.0, %v1080
      %v1082 = vpop.f32.mrf.mxu0
      %1083 = vdwg.mxu0
      %1084 = vmatpush.bf16.msra.mxu0 0
      %1085 = vmatpush.bf16.msra.mxu0 0
      %1086 = vmatpush.bf16.msra.mxu0 0
      %1087 = vmatpush.bf16.msra.mxu0 0
      %1088 = vmatpush.bf16.msra.mxu0 0
      %1089 = vmatpush.bf16.msra.mxu0 0
      %1090 = vmatpush.bf16.msra.mxu0 0
      %1091 = vmatpush.bf16.msra.mxu0 %v1069
      %1092 = vmatmul.bf16.gmra.mxu0 %v1063
      %v1093 = vpop.f32.mrf.mxu0
      %v1094 = vadd.f32 0.0, %v1093
      %v1095 = vpop.f32.mrf.mxu0
      %1096 = vdwg.mxu0
      %v1098 = vsel %vm476, %v1052, 0
      %v1101 = vsel %vm613, %v1050, 0
      %v1104 = vsel %vm613, %v1051, 0
      %1106 = vmatpush.bf16.msra.mxu0 0
      %1107 = vmatpush.bf16.msra.mxu0 0
      %1108 = vmatpush.bf16.msra.mxu0 0
      %1109 = vmatpush.bf16.msra.mxu0 0
      %1110 = vmatpush.bf16.msra.mxu0 0
      %1111 = vmatpush.bf16.msra.mxu0 0
      %1112 = vmatpush.bf16.msra.mxu0 0
      %1113 = vmatpush.bf16.msra.mxu0 %v1101
      %1114 = vmatmul.bf16.gmra.mxu0 %v1098
      %v1115 = vpop.f32.mrf.mxu0
      %v1116 = vadd.f32 %v1081, %v1115
      %v1117 = vpop.f32.mrf.mxu0
      %1118 = vdwg.mxu0
      %1119 = vmatpush.bf16.msra.mxu0 0
      %1120 = vmatpush.bf16.msra.mxu0 0
      %1121 = vmatpush.bf16.msra.mxu0 0
      %1122 = vmatpush.bf16.msra.mxu0 0
      %1123 = vmatpush.bf16.msra.mxu0 0
      %1124 = vmatpush.bf16.msra.mxu0 0
      %1125 = vmatpush.bf16.msra.mxu0 0
      %1126 = vmatpush.bf16.msra.mxu0 %v1104
      %1127 = vmatmul.bf16.gmra.mxu0 %v1098
      %v1128 = vpop.f32.mrf.mxu0
      %v1129 = vadd.f32 %v1094, %v1128
      %v1130 = vpop.f32.mrf.mxu0
      %1131 = vdwg.mxu0
      %s1132 = scalar_lea.vmem %s11, 2
      %v1133 = vld [vmem:[%s1132] sm:$0x1]
      %1134 = vrot.lane.b32.xlu0 %v1050, 126
      %v1135 = vpop.permute.xlu0 %1134
      %1136 = vrot.lane.b32.xlu0 %v1051, 126
      %v1137 = vpop.permute.xlu0 %1136
      %v1138 = vsel %vm687, %v1135, %v1137
      %v1140 = vsel %vm476, %v1133, 0
      %v1143 = vsel %vm613, %v1138, 0
      %v1146 = vsel %vm613, %v1137, 0
      %1148 = vmatpush.bf16.msra.mxu0 0
      %1149 = vmatpush.bf16.msra.mxu0 0
      %1150 = vmatpush.bf16.msra.mxu0 0
      %1151 = vmatpush.bf16.msra.mxu0 0
      %1152 = vmatpush.bf16.msra.mxu0 0
      %1153 = vmatpush.bf16.msra.mxu0 0
      %1154 = vmatpush.bf16.msra.mxu0 0
      %1155 = vmatpush.bf16.msra.mxu0 %v1143
      %1156 = vmatmul.bf16.gmra.mxu0 %v1140
      %v1157 = vpop.f32.mrf.mxu0
      %v1158 = vadd.f32 0.0, %v1157
      %v1159 = vpop.f32.mrf.mxu0
      %1160 = vdwg.mxu0
      %1161 = vmatpush.bf16.msra.mxu0 0
      %1162 = vmatpush.bf16.msra.mxu0 0
      %1163 = vmatpush.bf16.msra.mxu0 0
      %1164 = vmatpush.bf16.msra.mxu0 0
      %1165 = vmatpush.bf16.msra.mxu0 0
      %1166 = vmatpush.bf16.msra.mxu0 0
      %1167 = vmatpush.bf16.msra.mxu0 0
      %1168 = vmatpush.bf16.msra.mxu0 %v1146
      %1169 = vmatmul.bf16.gmra.mxu0 %v1140
      %v1170 = vpop.f32.mrf.mxu0
      %v1171 = vadd.f32 0.0, %v1170
      %v1172 = vpop.f32.mrf.mxu0
      %1173 = vdwg.mxu0
      %v1174 = vadd.f32 %v1116, %v1158
      %v1175 = vadd.f32 %v1129, %v1171
      %s1176 = scalar_lea.vmem %s11, 3
      %v1177 = vld [vmem:[%s1176] sm:$0x1]
      %1178 = vrot.lane.b32.xlu0 %v1050, 112
      %v1179 = vpop.permute.xlu0 %1178
      %1180 = vrot.lane.b32.xlu0 %v1051, 112
      %v1181 = vpop.permute.xlu0 %1180
      %v1182 = vsel %vm732, %v1179, %v1181
      %v1184 = vsel %vm476, %v1177, 0
      %v1187 = vsel %vm613, %v1182, 0
      %v1190 = vsel %vm613, %v1181, 0
      %1192 = vmatpush.bf16.msra.mxu0 0
      %1193 = vmatpush.bf16.msra.mxu0 0
      %1194 = vmatpush.bf16.msra.mxu0 0
      %1195 = vmatpush.bf16.msra.mxu0 0
      %1196 = vmatpush.bf16.msra.mxu0 0
      %1197 = vmatpush.bf16.msra.mxu0 0
      %1198 = vmatpush.bf16.msra.mxu0 0
      %1199 = vmatpush.bf16.msra.mxu0 %v1187
      %1200 = vmatmul.bf16.gmra.mxu0 %v1184
      %v1201 = vpop.f32.mrf.mxu0
      %v1202 = vadd.f32 0.0, %v1201
      %v1203 = vpop.f32.mrf.mxu0
      %1204 = vdwg.mxu0
      %1205 = vmatpush.bf16.msra.mxu0 0
      %1206 = vmatpush.bf16.msra.mxu0 0
      %1207 = vmatpush.bf16.msra.mxu0 0
      %1208 = vmatpush.bf16.msra.mxu0 0
      %1209 = vmatpush.bf16.msra.mxu0 0
      %1210 = vmatpush.bf16.msra.mxu0 0
      %1211 = vmatpush.bf16.msra.mxu0 0
      %1212 = vmatpush.bf16.msra.mxu0 %v1190
      %1213 = vmatmul.bf16.gmra.mxu0 %v1184
      %v1214 = vpop.f32.mrf.mxu0
      %v1215 = vadd.f32 0.0, %v1214
      %v1216 = vpop.f32.mrf.mxu0
      %1217 = vdwg.mxu0
      %v1218 = vadd.f32 %v1174, %v1202
      %v1219 = vadd.f32 %v1175, %v1215
      %s1220 = scalar_lea.vmem %s11, 4
      %v1221 = vld [vmem:[%s1220] sm:$0x1]
      %1222 = vrot.lane.b32.xlu0 %v1050, 111
      %v1223 = vpop.permute.xlu0 %1222
      %1224 = vrot.lane.b32.xlu0 %v1051, 111
      %v1225 = vpop.permute.xlu0 %1224
      %v1226 = vsel %vm777, %v1223, %v1225
      %v1228 = vsel %vm476, %v1221, 0
      %v1231 = vsel %vm613, %v1226, 0
      %v1234 = vsel %vm613, %v1225, 0
      %1236 = vmatpush.bf16.msra.mxu0 0
      %1237 = vmatpush.bf16.msra.mxu0 0
      %1238 = vmatpush.bf16.msra.mxu0 0
      %1239 = vmatpush.bf16.msra.mxu0 0
      %1240 = vmatpush.bf16.msra.mxu0 0
      %1241 = vmatpush.bf16.msra.mxu0 0
      %1242 = vmatpush.bf16.msra.mxu0 0
      %1243 = vmatpush.bf16.msra.mxu0 %v1231
      %1244 = vmatmul.bf16.gmra.mxu0 %v1228
      %v1245 = vpop.f32.mrf.mxu0
      %v1246 = vadd.f32 0.0, %v1245
      %v1247 = vpop.f32.mrf.mxu0
      %1248 = vdwg.mxu0
      %1249 = vmatpush.bf16.msra.mxu0 0
      %1250 = vmatpush.bf16.msra.mxu0 0
      %1251 = vmatpush.bf16.msra.mxu0 0
      %1252 = vmatpush.bf16.msra.mxu0 0
      %1253 = vmatpush.bf16.msra.mxu0 0
      %1254 = vmatpush.bf16.msra.mxu0 0
      %1255 = vmatpush.bf16.msra.mxu0 0
      %1256 = vmatpush.bf16.msra.mxu0 %v1234
      %1257 = vmatmul.bf16.gmra.mxu0 %v1228
      %v1258 = vpop.f32.mrf.mxu0
      %v1259 = vadd.f32 0.0, %v1258
      %v1260 = vpop.f32.mrf.mxu0
      %1261 = vdwg.mxu0
      %v1262 = vadd.f32 %v1218, %v1246
      %v1263 = vadd.f32 %v1219, %v1259
      %s1264 = scalar_lea.vmem %s11, 5
      %v1265 = vld [vmem:[%s1264] sm:$0x1]
      %1266 = vrot.lane.b32.xlu0 %v1050, 110
      %v1267 = vpop.permute.xlu0 %1266
      %1268 = vrot.lane.b32.xlu0 %v1051, 110
      %v1269 = vpop.permute.xlu0 %1268
      %v1270 = vsel %vm822, %v1267, %v1269
      %v1272 = vsel %vm476, %v1265, 0
      %v1275 = vsel %vm613, %v1270, 0
      %v1278 = vsel %vm613, %v1269, 0
      %1280 = vmatpush.bf16.msra.mxu0 0
      %1281 = vmatpush.bf16.msra.mxu0 0
      %1282 = vmatpush.bf16.msra.mxu0 0
      %1283 = vmatpush.bf16.msra.mxu0 0
      %1284 = vmatpush.bf16.msra.mxu0 0
      %1285 = vmatpush.bf16.msra.mxu0 0
      %1286 = vmatpush.bf16.msra.mxu0 0
      %1287 = vmatpush.bf16.msra.mxu0 %v1275
      %1288 = vmatmul.bf16.gmra.mxu0 %v1272
      %v1289 = vpop.f32.mrf.mxu0
      %v1290 = vadd.f32 0.0, %v1289
      %v1291 = vpop.f32.mrf.mxu0
      %1292 = vdwg.mxu0
      %1293 = vmatpush.bf16.msra.mxu0 0
      %1294 = vmatpush.bf16.msra.mxu0 0
      %1295 = vmatpush.bf16.msra.mxu0 0
      %1296 = vmatpush.bf16.msra.mxu0 0
      %1297 = vmatpush.bf16.msra.mxu0 0
      %1298 = vmatpush.bf16.msra.mxu0 0
      %1299 = vmatpush.bf16.msra.mxu0 0
      %1300 = vmatpush.bf16.msra.mxu0 %v1278
      %1301 = vmatmul.bf16.gmra.mxu0 %v1272
      %v1302 = vpop.f32.mrf.mxu0
      %v1303 = vadd.f32 0.0, %v1302
      %v1304 = vpop.f32.mrf.mxu0
      %1305 = vdwg.mxu0
      %v1306 = vadd.f32 %v1262, %v1290
      %v1307 = vadd.f32 %v1263, %v1303
      %s1308 = scalar_lea.vmem %s11, 6
      %v1309 = vld [vmem:[%s1308] sm:$0x1]
      %1310 = vrot.lane.b32.xlu0 %v1050, 96
      %v1311 = vpop.permute.xlu0 %1310
      %1312 = vrot.lane.b32.xlu0 %v1051, 96
      %v1313 = vpop.permute.xlu0 %1312
      %v1314 = vsel %vm867, %v1311, %v1313
      %v1316 = vsel %vm476, %v1309, 0
      %v1319 = vsel %vm613, %v1314, 0
      %v1322 = vsel %vm613, %v1313, 0
      %1324 = vmatpush.bf16.msra.mxu0 0
      %1325 = vmatpush.bf16.msra.mxu0 0
      %1326 = vmatpush.bf16.msra.mxu0 0
      %1327 = vmatpush.bf16.msra.mxu0 0
      %1328 = vmatpush.bf16.msra.mxu0 0
      %1329 = vmatpush.bf16.msra.mxu0 0
      %1330 = vmatpush.bf16.msra.mxu0 0
      %1331 = vmatpush.bf16.msra.mxu0 %v1319
      %1332 = vmatmul.bf16.gmra.mxu0 %v1316
      %v1333 = vpop.f32.mrf.mxu0
      %v1334 = vadd.f32 0.0, %v1333
      %v1335 = vpop.f32.mrf.mxu0
      %1336 = vdwg.mxu0
      %1337 = vmatpush.bf16.msra.mxu0 0
      %1338 = vmatpush.bf16.msra.mxu0 0
      %1339 = vmatpush.bf16.msra.mxu0 0
      %1340 = vmatpush.bf16.msra.mxu0 0
      %1341 = vmatpush.bf16.msra.mxu0 0
      %1342 = vmatpush.bf16.msra.mxu0 0
      %1343 = vmatpush.bf16.msra.mxu0 0
      %1344 = vmatpush.bf16.msra.mxu0 %v1322
      %1345 = vmatmul.bf16.gmra.mxu0 %v1316
      %v1346 = vpop.f32.mrf.mxu0
      %v1347 = vadd.f32 0.0, %v1346
      %v1348 = vpop.f32.mrf.mxu0
      %1349 = vdwg.mxu0
      %v1350 = vadd.f32 %v1306, %v1334
      %v1351 = vadd.f32 %v1307, %v1347
      %s1352 = scalar_lea.vmem %s11, 7
      %v1353 = vld [vmem:[%s1352] sm:$0x1]
      %1354 = vrot.lane.b32.xlu0 %v1050, 95
      %v1355 = vpop.permute.xlu0 %1354
      %1356 = vrot.lane.b32.xlu0 %v1051, 95
      %v1357 = vpop.permute.xlu0 %1356
      %v1358 = vsel %vm912, %v1355, %v1357
      %v1360 = vsel %vm476, %v1353, 0
      %v1363 = vsel %vm613, %v1358, 0
      %v1366 = vsel %vm613, %v1357, 0
      %1368 = vmatpush.bf16.msra.mxu0 0
      %1369 = vmatpush.bf16.msra.mxu0 0
      %1370 = vmatpush.bf16.msra.mxu0 0
      %1371 = vmatpush.bf16.msra.mxu0 0
      %1372 = vmatpush.bf16.msra.mxu0 0
      %1373 = vmatpush.bf16.msra.mxu0 0
      %1374 = vmatpush.bf16.msra.mxu0 0
      %1375 = vmatpush.bf16.msra.mxu0 %v1363
      %1376 = vmatmul.bf16.gmra.mxu0 %v1360
      %v1377 = vpop.f32.mrf.mxu0
      %v1378 = vadd.f32 0.0, %v1377
      %v1379 = vpop.f32.mrf.mxu0
      %1380 = vdwg.mxu0
      %1381 = vmatpush.bf16.msra.mxu0 0
      %1382 = vmatpush.bf16.msra.mxu0 0
      %1383 = vmatpush.bf16.msra.mxu0 0
      %1384 = vmatpush.bf16.msra.mxu0 0
      %1385 = vmatpush.bf16.msra.mxu0 0
      %1386 = vmatpush.bf16.msra.mxu0 0
      %1387 = vmatpush.bf16.msra.mxu0 0
      %1388 = vmatpush.bf16.msra.mxu0 %v1366
      %1389 = vmatmul.bf16.gmra.mxu0 %v1360
      %v1390 = vpop.f32.mrf.mxu0
      %v1391 = vadd.f32 0.0, %v1390
      %v1392 = vpop.f32.mrf.mxu0
      %1393 = vdwg.mxu0
      %v1394 = vadd.f32 %v1350, %v1378
      %v1395 = vadd.f32 %v1351, %v1391
      %s1396 = scalar_lea.vmem %s11, 8
      %v1397 = vld [vmem:[%s1396] sm:$0x1]
      %1398 = vrot.lane.b32.xlu0 %v1050, 94
      %v1399 = vpop.permute.xlu0 %1398
      %1400 = vrot.lane.b32.xlu0 %v1051, 94
      %v1401 = vpop.permute.xlu0 %1400
      %v1402 = vsel %vm957, %v1399, %v1401
      %v1404 = vsel %vm476, %v1397, 0
      %v1407 = vsel %vm613, %v1402, 0
      %v1410 = vsel %vm613, %v1401, 0
      %1412 = vmatpush.bf16.msra.mxu0 0
      %1413 = vmatpush.bf16.msra.mxu0 0
      %1414 = vmatpush.bf16.msra.mxu0 0
      %1415 = vmatpush.bf16.msra.mxu0 0
      %1416 = vmatpush.bf16.msra.mxu0 0
      %1417 = vmatpush.bf16.msra.mxu0 0
      %1418 = vmatpush.bf16.msra.mxu0 0
      %1419 = vmatpush.bf16.msra.mxu0 %v1407
      %1420 = vmatmul.bf16.gmra.mxu0 %v1404
      %v1421 = vpop.f32.mrf.mxu0
      %v1422 = vadd.f32 0.0, %v1421
      %v1423 = vpop.f32.mrf.mxu0
      %1424 = vdwg.mxu0
      %1425 = vmatpush.bf16.msra.mxu0 0
      %1426 = vmatpush.bf16.msra.mxu0 0
      %1427 = vmatpush.bf16.msra.mxu0 0
      %1428 = vmatpush.bf16.msra.mxu0 0
      %1429 = vmatpush.bf16.msra.mxu0 0
      %1430 = vmatpush.bf16.msra.mxu0 0
      %1431 = vmatpush.bf16.msra.mxu0 0
      %1432 = vmatpush.bf16.msra.mxu0 %v1410
      %1433 = vmatmul.bf16.gmra.mxu0 %v1404
      %v1434 = vpop.f32.mrf.mxu0
      %v1435 = vadd.f32 0.0, %v1434
      %v1436 = vpop.f32.mrf.mxu0
      %1437 = vdwg.mxu0
      %v1438 = vadd.f32 %v1394, %v1422
      %v1439 = vadd.f32 %v1395, %v1435
      %v1440 = vld [vmem:[%s12] sm:$0x3]
      %1442 = vset.pattern.permute.xlu0 0
      %1443 = vperm.xlu0 %1442, %v1440
      %v1444 = vpop.permute.xlu0 %1443
      %v1446 = vadd.f32 %v1438, %v1444
      %v1447 = vadd.f32 %v1439, %v1444
      %v1450 = vrot.slane %v1446, 4
      %v1451 = vrot.slane %v1447, 4
      %v1454 = vsel %vm480, %v1002, %v1450
      %v1455 = vsel %vm480, %v1003, %v1451
      %1456 = vst [vmem:[%s440] sm:$0x3f] %v1454
      %vm1457 = vcmask 766976
      %1458 = vst.msk [vmem:[%s440 + $0x8] sm:$0x3f] %vm1457, %v1455
      %p1459 = scmp.lt.s32.totalorder %s24, 1
      %s1460 = scalar_select %p1459, %s24, 1
      %s1461 = smul.addr %s1460, 2
      %s1462 = smul.addr %s1461, 8
      %s1463 = scalar_lea.vmem %s13, %s1462
      // Predicated region
      $region73: #{slim_conv_forward.1} parent=71 // pred_check
        %p1464 = pneg %p320
      $region74: #{slim_conv_forward.1} parent=71 // pred_check_branch
        %1466 = sbr.rel (%p1464) target = $region76
      $region75: #{slim_conv_forward.1} parent=71 // pred_region
        _
      $region76: #{slim_conv_forward.1} parent=71 // pred_fallthru
        _
    $region72: #{slim_conv_forward.1} parent=5 // pred_fallthru
      _
    %p1467 = scmp.le.s32.totalorder 2, %s19
    // Predicated region
    $region77: #{slim_conv_forward.1} parent=5 // pred_check
      %p1468 = pneg %p1467
    $region78: #{slim_conv_forward.1} parent=5 // pred_check_branch
      %1470 = sbr.rel (%p1468) target = $region80
    $region79: #{slim_conv_forward.1} parent=5 // pred_region
      %s1471 = ssub.s32 %s19, 2
      // Predicated region
      $region81: #{slim_conv_forward.1} parent=79 // pred_check
        %p1472 = pneg %p326
      $region82: #{slim_conv_forward.1} parent=79 // pred_check_branch
        %1474 = sbr.rel (%p1472) target = $region84
      $region83: #{slim_conv_forward.1} parent=79 // pred_region
        %p1475 = scmp.lt.s32.totalorder %s25, 1
        %s1476 = scalar_select %p1475, %s25, 1
        %s1477 = smul.addr %s1476, 2
        %s1478 = smul.addr %s1477, 8
        %s1479 = scalar_lea.vmem %s13, %s1478
      $region84: #{slim_conv_forward.1} parent=79 // pred_fallthru
        _
    $region80: #{slim_conv_forward.1} parent=5 // pred_fallthru
      _
  $region6: #{slim_conv_forward.1} parent=0 // loop_footer
    %s23 = sadd.s32 1, %s19
  $region7: #{slim_conv_forward.1} parent=0 // loop_footer_branch
    %18 = sbr.rel target = $region3
  $region8: #{slim_conv_forward.1} parent=0 // loop_exit
    _

</llo_original>
